<compile_context>
chip_gen: v7x
topology: tpu7x:2x2x1
jax: 0.10.0
libtpu: 0.0.40
codegen_flags: <defaults>
</compile_context>

<pallas_src>
import functools

import jax
import jax.numpy as jnp
from jax.experimental import pallas as pl
from jax.experimental.pallas import tpu as pltpu

BN_EPS = 1e-5
LANES = 128


def _round_up(x, m):
    return (x + m - 1) // m * m


def _vmem_limit_bytes():
    """Per-generation VMEM budget: ~3/4 of physical, capped at 100 MiB.

    v7x: 64 MiB physical -> 48 MiB; v5e/v6e: 128 MiB -> 96 MiB.
    """
    try:
        cap = int(pltpu.get_tpu_info().vmem_capacity_bytes)
        return min((cap * 3) // 4, 100 * 1024 * 1024)
    except Exception:  # pragma: no cover - conservative fallback
        return 48 * 1024 * 1024


def _pack_taps(x_ref, lhs_ref, h_idx, *, th, w_out, k, dil, cin):
    """Pack the k*k shifted windows of one H-tile into the folded matmul LHS.

    x_ref:   (Hp, Wp, Cin) bf16 - full reflection-padded image of one batch elem.
    lhs_ref: (th*w_out, k*k*Cin) bf16 VMEM scratch - folded matmul operand.
    """
    row0 = h_idx * th
    for kh in range(k):
        for kw in range(k):
            tap = kh * k + kw
            win = x_ref[pl.ds(row0 + kh * dil, th), pl.ds(kw * dil, w_out), :]
            lhs_ref[:, tap * cin:(tap + 1) * cin] = win.reshape(th * w_out, cin)


def _stats_kernel(x_ref, w_ref, sum_ref, sq_ref, lhs_ref,
                  *, th, w_out, k, dil, cin, o):
    """Pass 1: per-batch partial sum / sum-of-squares of the conv output."""
    h_i = pl.program_id(1)

    @pl.when(h_i == 0)
    def _init():
        sum_ref[...] = jnp.zeros_like(sum_ref)
        sq_ref[...] = jnp.zeros_like(sq_ref)

    _pack_taps(x_ref, lhs_ref, h_i, th=th, w_out=w_out, k=k, dil=dil, cin=cin)
    acc = jnp.dot(lhs_ref[...], w_ref[...], preferred_element_type=jnp.float32)
    acc = acc[:, :o]                      # drop lane padding of the RHS
    # Per-tile partial sums (fp32); tiles then batches are combined pairwise,
    # which keeps rounding error well below the E[x^2]-mean^2 cancellation.
    sum_ref[...] += jnp.sum(acc, axis=0, keepdims=True)
    sq_ref[...] += jnp.sum(acc * acc, axis=0, keepdims=True)


def _apply_kernel(x_ref, w_ref, scale_ref, shift_ref, o_ref, lhs_ref,
                  *, th, w_out, k, dil, cin, o):
    """Pass 2: folded conv matmul -> BN FMA (scale/shift) -> ReLU -> store."""
    h_i = pl.program_id(1)
    _pack_taps(x_ref, lhs_ref, h_i, th=th, w_out=w_out, k=k, dil=dil, cin=cin)
    acc = jnp.dot(lhs_ref[...], w_ref[...], preferred_element_type=jnp.float32)
    y = acc[:, :o] * scale_ref[...] + shift_ref[...]   # single FMA per element
    o_ref[...] = jnp.maximum(y, 0.0).astype(o_ref.dtype)


def _pick_h_tile(H, W, Hp, Wp, cin, k, o_pad, target_bytes=8 * 1024 * 1024):
    """Largest divisor of H whose total VMEM footprint stays under budget."""
    kk_cin = k * k * cin
    # Lane-padded VMEM footprints: bf16 image block (double-buffered), bf16
    # packed operand scratch, fp32 dot temporary, fp32 output block (x2 bufs).
    img = Hp * _round_up(Wp, 8) * _round_up(cin, LANES) * 2

    def footprint(th):
        rows = th * W
        lhs = _round_up(rows, 16) * _round_up(kk_cin, LANES) * 2
        acc = _round_up(rows, 8) * o_pad * 4
        out = _round_up(rows, 8) * LANES * 4
        return 2 * img + lhs + acc + 2 * out

    divisors = [d for d in range(H, 0, -1) if H % d == 0]
    for th in divisors:                         # largest first
        if th != H and (th * W) % 16 != 0:      # bf16 sublane-pack alignment
            continue
        if footprint(th) <= target_bytes:
            return th
    for th in reversed(divisors):               # fallback: smallest aligned
        if th == H or (th * W) % 16 == 0:
            return th
    return H


def conv2d_block(x, weight, gamma, beta, *, kernel_size=3, dilation=1,
                 h_tile=None, out_dtype=jnp.float32):
    """x: (N, Cin, H, W) f32, weight: (O, Cin, k, k), gamma/beta: (O,)."""
    N, Cin, H, W = x.shape
    O = weight.shape[0]
    k, dil = kernel_size, dilation
    assert weight.shape == (O, Cin, k, k), "groups=1, stride=1 only"
    assert k % 2 == 1, "'same' reflection padding assumes odd kernel_size"
    pad = (1 + dil * (k - 1)) // 2
    assert pad < min(H, W), "reflection pad must be smaller than the image"
    Hp, Wp = H + 2 * pad, W + 2 * pad

    kk_cin = k * k * Cin
    o_pad = _round_up(max(O, 1), LANES)       # MXU RHS lane padding only

    # NCHW -> NHWC, reflection pad, bf16 matmul operand (fp32 accumulation).
    # TODO(synk): accept NHWC end-to-end / fuse this pad+cast into the producer
    # so the padded image is never materialized separately in HBM.
    x_nhwc = jnp.transpose(x, (0, 2, 3, 1)).astype(jnp.bfloat16)
    xp = jnp.pad(x_nhwc, ((0, 0), (pad, pad), (pad, pad), (0, 0)),
                 mode="reflect")

    # Weights folded for a single wide-K matmul:
    # (O, Cin, kh, kw) -> (kh, kw, Cin, O) -> (k*k*Cin, o_pad), zero-padded O.
    wmat = jnp.transpose(weight, (2, 3, 1, 0)).reshape(kk_cin, O)
    wmat = jnp.pad(wmat, ((0, 0), (0, o_pad - O))).astype(jnp.bfloat16)

    if h_tile is None:
        h_tile = _pick_h_tile(H, W, Hp, Wp, Cin, k, o_pad)
    assert H % h_tile == 0 and (h_tile == H or (h_tile * W) % 8 == 0), \
        "h_tile must divide H and give a sublane-aligned row tile"
    n_h = H // h_tile
    rows = h_tile * W
    grid = (N, n_h)
    vmem_limit = _vmem_limit_bytes()

    x_spec = pl.BlockSpec((None, Hp, Wp, Cin), lambda n, h: (n, 0, 0, 0))
    w_spec = pl.BlockSpec((kk_cin, o_pad), lambda n, h: (0, 0))
    stat_spec = pl.BlockSpec((None, 1, O), lambda n, h: (n, 0, 0))
    vec_spec = pl.BlockSpec((1, O), lambda n, h: (0, 0))
    out_spec = pl.BlockSpec((None, rows, O), lambda n, h: (n, h, 0))
    lhs_scratch = pltpu.VMEM((rows, kk_cin), jnp.bfloat16)

    common = dict(th=h_tile, w_out=W, k=k, dil=dil, cin=Cin, o=O)

    # ---- Pass 1: conv tiles -> per-batch partial BN stats (N parallel). ----
    part_sum, part_sq = pl.pallas_call(
        functools.partial(_stats_kernel, **common),
        out_shape=(jax.ShapeDtypeStruct((N, 1, O), jnp.float32),
                   jax.ShapeDtypeStruct((N, 1, O), jnp.float32)),
        grid=grid,
        in_specs=[x_spec, w_spec],
        out_specs=(stat_spec, stat_spec),
        scratch_shapes=[lhs_scratch],
        compiler_params=pltpu.CompilerParams(
            dimension_semantics=("parallel", "arbitrary"),
            vmem_limit_bytes=vmem_limit),
    )(xp, wmat)

    # Fold BN (training-mode batch stats, biased variance) into one FMA.
    count = float(N * H * W)
    ch_sum = jnp.sum(part_sum[:, 0, :], axis=0)
    ch_sq = jnp.sum(part_sq[:, 0, :], axis=0)
    mean = ch_sum / count
    # E[x^2]-mean^2 can go slightly negative from cancellation -> clamp.
    var = jnp.maximum(ch_sq / count - mean * mean, 0.0)
    scale = (gamma.astype(jnp.float32) * jax.lax.rsqrt(var + BN_EPS))
    shift = beta.astype(jnp.float32) - mean * scale
    scale = scale.reshape(1, O)
    shift = shift.reshape(1, O)

    # ---- Pass 2: conv + normalize + ReLU, narrow (O-wide) writeback. ----
    out_flat = pl.pallas_call(
        functools.partial(_apply_kernel, **common),
        out_shape=jax.ShapeDtypeStruct((N, H * W, O), out_dtype),
        grid=grid,
        in_specs=[x_spec, w_spec, vec_spec, vec_spec],
        out_specs=out_spec,
        scratch_shapes=[lhs_scratch],
        compiler_params=pltpu.CompilerParams(
            dimension_semantics=("parallel", "parallel"),
            vmem_limit_bytes=vmem_limit),
    )(xp, wmat, scale, shift)

    # Back to the module's NCHW contract (NHWC consumers can skip this).
    out = out_flat.reshape(N, H, W, O)
    return jnp.transpose(out, (0, 3, 1, 2))


def _reference(x, weight, gamma, beta, k, dil):
    """Pure-JAX reference using the same bf16 conv operands / fp32 math."""
    N, Cin, H, W = x.shape
    O = weight.shape[0]
    pad = (1 + dil * (k - 1)) // 2
    xn = jnp.transpose(x, (0, 2, 3, 1)).astype(jnp.bfloat16).astype(jnp.float32)
    xp = jnp.pad(xn, ((0, 0), (pad, pad), (pad, pad), (0, 0)), mode="reflect")
    wk = jnp.transpose(weight, (2, 3, 1, 0)).astype(jnp.bfloat16).astype(jnp.float32)
    acc = jnp.zeros((N, H, W, O), jnp.float32)
    for kh in range(k):
        for kw in range(k):
            win = xp[:, kh * dil:kh * dil + H, kw * dil:kw * dil + W, :]
            acc = acc + jnp.einsum("nhwc,co->nhwo", win, wk[kh, kw],
                                   precision=jax.lax.Precision.HIGHEST)
    mean = jnp.mean(acc, axis=(0, 1, 2))
    var = jnp.maximum(jnp.mean(acc * acc, axis=(0, 1, 2)) - mean * mean, 0.0)
    scale = gamma * jax.lax.rsqrt(var + BN_EPS)
    shift = beta - mean * scale
    y = jnp.maximum(acc * scale + shift, 0.0)
    return jnp.transpose(y, (0, 3, 1, 2))


if __name__ == "__main__":
    # Conv2dBlock(in_channels=4, out_channels=8, kernel_size=3) with defaults
    # (stride=1, dilation=1, groups=1, bias=False, norm=True, act='relu',
    # reflection 'same' padding).
    N, Cin, H, W = 2, 4, 16, 16
    O, k = 8, 3

    key = jax.random.PRNGKey(0)
    kx, kw_key = jax.random.split(key)
    x = jax.random.normal(kx, (N, Cin, H, W), dtype=jnp.float32)
    fan_in = Cin * k * k
    weight = jax.random.normal(kw_key, (O, Cin, k, k),
                               dtype=jnp.float32) / jnp.sqrt(fan_in)
    gamma = jnp.ones((O,), dtype=jnp.float32)   # BatchNorm2d default weight
    beta = jnp.zeros((O,), dtype=jnp.float32)   # BatchNorm2d default bias

    # h_tile=8 -> grid (2, 2): exercises the tiled path + cross-tile BN stats.
    out = conv2d_block(x, weight, gamma, beta, kernel_size=k, dilation=1,
                       h_tile=8)
    out = jax.block_until_ready(out)
    assert out.shape == (N, O, H, W)

    ref = _reference(x, weight, gamma, beta, k, 1)
    err = float(jnp.max(jnp.abs(out - ref)))
    assert err < 1e-2, f"max abs err {err}"
    print("KERNEL_OK")
</pallas_src>

<mosaic_0001>
module attributes {stable_mosaic.version = 11 : i64} {
  func.func @_stats_kernel(%arg0: i32, %arg1: i32, %arg2: memref<1x18x18x4xbf16, #tpu.memory_space<vmem>>, %arg3: memref<36x128xbf16, #tpu.memory_space<vmem>>, %arg4: memref<1x1x8xf32, #tpu.memory_space<vmem>>, %arg5: memref<1x1x8xf32, #tpu.memory_space<vmem>>, %arg6: memref<128x36xbf16, #tpu.memory_space<vmem>>) attributes {dimension_semantics = [#tpu.dimension_semantics<parallel>, #tpu.dimension_semantics<arbitrary>], iteration_bounds = array<i64: 2, 2>, scalar_prefetch = 0 : i64, scratch_operands = 1 : i64, tpu.core_type = #tpu.core_type<tc>, window_params = [{transform_indices = @transform_0, window_bounds = array<i64: 1, 18, 18, 4>}, {pipeline_mode = #tpu.pipeline_mode<synchronous>, transform_indices = @transform_1, window_bounds = array<i64: 36, 128>}, {transform_indices = @transform_2, window_bounds = array<i64: 1, 1, 8>}, {transform_indices = @transform_3, window_bounds = array<i64: 1, 1, 8>}]} {
    %c0_i32 = arith.constant 0 : i32
    %0 = arith.cmpi eq, %arg1, %c0_i32 : i32
    %1 = arith.extui %0 : i1 to i32
    %c0_i32_0 = arith.constant 0 : i32
    %2 = arith.cmpi ne, %1, %c0_i32_0 : i32
    scf.if %2 {
      %cst_60 = arith.constant 0.000000e+00 : f32
      %79 = vector.broadcast %cst_60 : f32 to vector<1x8xf32>
      %c0_61 = arith.constant 0 : index
      %c0_62 = arith.constant 0 : index
      %c0_63 = arith.constant 0 : index
      %80 = vector.load %arg4[%c0_61, %c0_62, %c0_63] : memref<1x1x8xf32, #tpu.memory_space<vmem>>, vector<1x1x8xf32>
      %81 = vector.shape_cast %80 : vector<1x1x8xf32> to vector<1x8xf32>
      %82 = vector.shape_cast %79 : vector<1x8xf32> to vector<1x1x8xf32>
      tpu.vector_store %arg4[%c0_61, %c0_62, %c0_63], %82 {strides = array<i32>} : memref<1x1x8xf32, #tpu.memory_space<vmem>>, vector<1x1x8xf32>,
      %cst_64 = arith.constant 0.000000e+00 : f32
      %83 = vector.broadcast %cst_64 : f32 to vector<1x8xf32>
      %c0_65 = arith.constant 0 : index
      %c0_66 = arith.constant 0 : index
      %c0_67 = arith.constant 0 : index
      %84 = vector.load %arg5[%c0_65, %c0_66, %c0_67] : memref<1x1x8xf32, #tpu.memory_space<vmem>>, vector<1x1x8xf32>
      %85 = vector.shape_cast %84 : vector<1x1x8xf32> to vector<1x8xf32>
      %86 = vector.shape_cast %83 : vector<1x8xf32> to vector<1x1x8xf32>
      tpu.vector_store %arg5[%c0_65, %c0_66, %c0_67], %86 {strides = array<i32>} : memref<1x1x8xf32, #tpu.memory_space<vmem>>, vector<1x1x8xf32>,
    } else {
    }
    %c8_i32 = arith.constant 8 : i32
    %3 = arith.muli %arg1, %c8_i32 : i32
    %c0_i32_1 = arith.constant 0 : i32
    %4 = arith.addi %3, %c0_i32_1 : i32
    %c0 = arith.constant 0 : index
    %5 = arith.index_cast %4 : i32 to index
    %c0_2 = arith.constant 0 : index
    %c0_3 = arith.constant 0 : index
    %6 = vector.load %arg2[%c0, %5, %c0_2, %c0_3] : memref<1x18x18x4xbf16, #tpu.memory_space<vmem>>, vector<1x8x16x4xbf16>
    %7 = vector.shape_cast %6 : vector<1x8x16x4xbf16> to vector<8x16x4xbf16>
    %8 = vector.shape_cast %7 : vector<8x16x4xbf16> to vector<128x4xbf16>
    %c0_4 = arith.constant 0 : index
    %c0_5 = arith.constant 0 : index
    %9 = vector.load %arg6[%c0_4, %c0_5] : memref<128x36xbf16, #tpu.memory_space<vmem>>, vector<128x4xbf16>
    tpu.vector_store %arg6[%c0_4, %c0_5], %8 {strides = array<i32>} : memref<128x36xbf16, #tpu.memory_space<vmem>>, vector<128x4xbf16>,
    %c0_i32_6 = arith.constant 0 : i32
    %10 = arith.addi %3, %c0_i32_6 : i32
    %c0_7 = arith.constant 0 : index
    %11 = arith.index_cast %10 : i32 to index
    %c1 = arith.constant 1 : index
    %c0_8 = arith.constant 0 : index
    %12 = vector.load %arg2[%c0_7, %11, %c1, %c0_8] : memref<1x18x18x4xbf16, #tpu.memory_space<vmem>>, vector<1x8x16x4xbf16>
    %13 = vector.shape_cast %12 : vector<1x8x16x4xbf16> to vector<8x16x4xbf16>
    %14 = vector.shape_cast %13 : vector<8x16x4xbf16> to vector<128x4xbf16>
    %c0_9 = arith.constant 0 : index
    %c4 = arith.constant 4 : index
    %15 = vector.load %arg6[%c0_9, %c4] : memref<128x36xbf16, #tpu.memory_space<vmem>>, vector<128x4xbf16>
    tpu.vector_store %arg6[%c0_9, %c4], %14 {strides = array<i32>} : memref<128x36xbf16, #tpu.memory_space<vmem>>, vector<128x4xbf16>,
    %c0_i32_10 = arith.constant 0 : i32
    %16 = arith.addi %3, %c0_i32_10 : i32
    %c0_11 = arith.constant 0 : index
    %17 = arith.index_cast %16 : i32 to index
    %c2 = arith.constant 2 : index
    %c0_12 = arith.constant 0 : index
    %18 = vector.load %arg2[%c0_11, %17, %c2, %c0_12] : memref<1x18x18x4xbf16, #tpu.memory_space<vmem>>, vector<1x8x16x4xbf16>
    %19 = vector.shape_cast %18 : vector<1x8x16x4xbf16> to vector<8x16x4xbf16>
    %20 = vector.shape_cast %19 : vector<8x16x4xbf16> to vector<128x4xbf16>
    %c0_13 = arith.constant 0 : index
    %c8 = arith.constant 8 : index
    %21 = vector.load %arg6[%c0_13, %c8] : memref<128x36xbf16, #tpu.memory_space<vmem>>, vector<128x4xbf16>
    tpu.vector_store %arg6[%c0_13, %c8], %20 {strides = array<i32>} : memref<128x36xbf16, #tpu.memory_space<vmem>>, vector<128x4xbf16>,
    %c1_i32 = arith.constant 1 : i32
    %22 = arith.addi %3, %c1_i32 : i32
    %c0_14 = arith.constant 0 : index
    %23 = arith.index_cast %22 : i32 to index
    %c0_15 = arith.constant 0 : index
    %c0_16 = arith.constant 0 : index
    %24 = vector.load %arg2[%c0_14, %23, %c0_15, %c0_16] : memref<1x18x18x4xbf16, #tpu.memory_space<vmem>>, vector<1x8x16x4xbf16>
    %25 = vector.shape_cast %24 : vector<1x8x16x4xbf16> to vector<8x16x4xbf16>
    %26 = vector.shape_cast %25 : vector<8x16x4xbf16> to vector<128x4xbf16>
    %c0_17 = arith.constant 0 : index
    %c12 = arith.constant 12 : index
    %27 = vector.load %arg6[%c0_17, %c12] : memref<128x36xbf16, #tpu.memory_space<vmem>>, vector<128x4xbf16>
    tpu.vector_store %arg6[%c0_17, %c12], %26 {strides = array<i32>} : memref<128x36xbf16, #tpu.memory_space<vmem>>, vector<128x4xbf16>,
    %c1_i32_18 = arith.constant 1 : i32
    %28 = arith.addi %3, %c1_i32_18 : i32
    %c0_19 = arith.constant 0 : index
    %29 = arith.index_cast %28 : i32 to index
    %c1_20 = arith.constant 1 : index
    %c0_21 = arith.constant 0 : index
    %30 = vector.load %arg2[%c0_19, %29, %c1_20, %c0_21] : memref<1x18x18x4xbf16, #tpu.memory_space<vmem>>, vector<1x8x16x4xbf16>
    %31 = vector.shape_cast %30 : vector<1x8x16x4xbf16> to vector<8x16x4xbf16>
    %32 = vector.shape_cast %31 : vector<8x16x4xbf16> to vector<128x4xbf16>
    %c0_22 = arith.constant 0 : index
    %c16 = arith.constant 16 : index
    %33 = vector.load %arg6[%c0_22, %c16] : memref<128x36xbf16, #tpu.memory_space<vmem>>, vector<128x4xbf16>
    tpu.vector_store %arg6[%c0_22, %c16], %32 {strides = array<i32>} : memref<128x36xbf16, #tpu.memory_space<vmem>>, vector<128x4xbf16>,
    %c1_i32_23 = arith.constant 1 : i32
    %34 = arith.addi %3, %c1_i32_23 : i32
    %c0_24 = arith.constant 0 : index
    %35 = arith.index_cast %34 : i32 to index
    %c2_25 = arith.constant 2 : index
    %c0_26 = arith.constant 0 : index
    %36 = vector.load %arg2[%c0_24, %35, %c2_25, %c0_26] : memref<1x18x18x4xbf16, #tpu.memory_space<vmem>>, vector<1x8x16x4xbf16>
    %37 = vector.shape_cast %36 : vector<1x8x16x4xbf16> to vector<8x16x4xbf16>
    %38 = vector.shape_cast %37 : vector<8x16x4xbf16> to vector<128x4xbf16>
    %c0_27 = arith.constant 0 : index
    %c20 = arith.constant 20 : index
    %39 = vector.load %arg6[%c0_27, %c20] : memref<128x36xbf16, #tpu.memory_space<vmem>>, vector<128x4xbf16>
    tpu.vector_store %arg6[%c0_27, %c20], %38 {strides = array<i32>} : memref<128x36xbf16, #tpu.memory_space<vmem>>, vector<128x4xbf16>,
    %c2_i32 = arith.constant 2 : i32
    %40 = arith.addi %3, %c2_i32 : i32
    %c0_28 = arith.constant 0 : index
    %41 = arith.index_cast %40 : i32 to index
    %c0_29 = arith.constant 0 : index
    %c0_30 = arith.constant 0 : index
    %42 = vector.load %arg2[%c0_28, %41, %c0_29, %c0_30] : memref<1x18x18x4xbf16, #tpu.memory_space<vmem>>, vector<1x8x16x4xbf16>
    %43 = vector.shape_cast %42 : vector<1x8x16x4xbf16> to vector<8x16x4xbf16>
    %44 = vector.shape_cast %43 : vector<8x16x4xbf16> to vector<128x4xbf16>
    %c0_31 = arith.constant 0 : index
    %c24 = arith.constant 24 : index
    %45 = vector.load %arg6[%c0_31, %c24] : memref<128x36xbf16, #tpu.memory_space<vmem>>, vector<128x4xbf16>
    tpu.vector_store %arg6[%c0_31, %c24], %44 {strides = array<i32>} : memref<128x36xbf16, #tpu.memory_space<vmem>>, vector<128x4xbf16>,
    %c2_i32_32 = arith.constant 2 : i32
    %46 = arith.addi %3, %c2_i32_32 : i32
    %c0_33 = arith.constant 0 : index
    %47 = arith.index_cast %46 : i32 to index
    %c1_34 = arith.constant 1 : index
    %c0_35 = arith.constant 0 : index
    %48 = vector.load %arg2[%c0_33, %47, %c1_34, %c0_35] : memref<1x18x18x4xbf16, #tpu.memory_space<vmem>>, vector<1x8x16x4xbf16>
    %49 = vector.shape_cast %48 : vector<1x8x16x4xbf16> to vector<8x16x4xbf16>
    %50 = vector.shape_cast %49 : vector<8x16x4xbf16> to vector<128x4xbf16>
    %c0_36 = arith.constant 0 : index
    %c28 = arith.constant 28 : index
    %51 = vector.load %arg6[%c0_36, %c28] : memref<128x36xbf16, #tpu.memory_space<vmem>>, vector<128x4xbf16>
    tpu.vector_store %arg6[%c0_36, %c28], %50 {strides = array<i32>} : memref<128x36xbf16, #tpu.memory_space<vmem>>, vector<128x4xbf16>,
    %c2_i32_37 = arith.constant 2 : i32
    %52 = arith.addi %3, %c2_i32_37 : i32
    %c0_38 = arith.constant 0 : index
    %53 = arith.index_cast %52 : i32 to index
    %c2_39 = arith.constant 2 : index
    %c0_40 = arith.constant 0 : index
    %54 = vector.load %arg2[%c0_38, %53, %c2_39, %c0_40] : memref<1x18x18x4xbf16, #tpu.memory_space<vmem>>, vector<1x8x16x4xbf16>
    %55 = vector.shape_cast %54 : vector<1x8x16x4xbf16> to vector<8x16x4xbf16>
    %56 = vector.shape_cast %55 : vector<8x16x4xbf16> to vector<128x4xbf16>
    %c0_41 = arith.constant 0 : index
    %c32 = arith.constant 32 : index
    %57 = vector.load %arg6[%c0_41, %c32] : memref<128x36xbf16, #tpu.memory_space<vmem>>, vector<128x4xbf16>
    tpu.vector_store %arg6[%c0_41, %c32], %56 {strides = array<i32>} : memref<128x36xbf16, #tpu.memory_space<vmem>>, vector<128x4xbf16>,
    %c0_42 = arith.constant 0 : index
    %c0_43 = arith.constant 0 : index
    %58 = vector.load %arg6[%c0_42, %c0_43] : memref<128x36xbf16, #tpu.memory_space<vmem>>, vector<128x36xbf16>
    %c0_44 = arith.constant 0 : index
    %c0_45 = arith.constant 0 : index
    %59 = vector.load %arg3[%c0_44, %c0_45] : memref<36x128xbf16, #tpu.memory_space<vmem>>, vector<36x128xbf16>
    %cst = arith.constant dense<0.000000e+00> : vector<128x128xf32>
    %60 = tpu.matmul %58, %59, %cst {dimension_numbers = #tpu.dot_dimension_numbers<[1], [0], [0], [1], [0, 0, 1, 1], [], []>} : vector<128x36xbf16>, vector<36x128xbf16>, vector<128x128xf32> -> vector<128x128xf32>
    %61 = vector.extract_strided_slice %60 {offsets = [0, 0], sizes = [128, 8], strides = [1, 1]} : vector<128x128xf32> to vector<128x8xf32>
    %c0_46 = arith.constant 0 : index
    %c0_47 = arith.constant 0 : index
    %c0_48 = arith.constant 0 : index
    %62 = vector.load %arg4[%c0_46, %c0_47, %c0_48] : memref<1x1x8xf32, #tpu.memory_space<vmem>>, vector<1x1x8xf32>
    %63 = vector.shape_cast %62 : vector<1x1x8xf32> to vector<1x8xf32>
    %cst_49 = arith.constant dense<0.000000e+00> : vector<8xf32>
    %64 = vector.multi_reduction <add>, %61, %cst_49 [0] : vector<128x8xf32> to vector<8xf32>
    %65 = vector.shape_cast %64 : vector<8xf32> to vector<1x8xf32>
    %66 = arith.addf %63, %65 : vector<1x8xf32>
    %c0_50 = arith.constant 0 : index
    %c0_51 = arith.constant 0 : index
    %c0_52 = arith.constant 0 : index
    %67 = vector.load %arg4[%c0_50, %c0_51, %c0_52] : memref<1x1x8xf32, #tpu.memory_space<vmem>>, vector<1x1x8xf32>
    %68 = vector.shape_cast %67 : vector<1x1x8xf32> to vector<1x8xf32>
    %69 = vector.shape_cast %66 : vector<1x8xf32> to vector<1x1x8xf32>
    tpu.vector_store %arg4[%c0_50, %c0_51, %c0_52], %69 {strides = array<i32>} : memref<1x1x8xf32, #tpu.memory_space<vmem>>, vector<1x1x8xf32>,
    %c0_53 = arith.constant 0 : index
    %c0_54 = arith.constant 0 : index
    %c0_55 = arith.constant 0 : index
    %70 = vector.load %arg5[%c0_53, %c0_54, %c0_55] : memref<1x1x8xf32, #tpu.memory_space<vmem>>, vector<1x1x8xf32>
    %71 = vector.shape_cast %70 : vector<1x1x8xf32> to vector<1x8xf32>
    %72 = arith.mulf %61, %61 : vector<128x8xf32>
    %cst_56 = arith.constant dense<0.000000e+00> : vector<8xf32>
    %73 = vector.multi_reduction <add>, %72, %cst_56 [0] : vector<128x8xf32> to vector<8xf32>
    %74 = vector.shape_cast %73 : vector<8xf32> to vector<1x8xf32>
    %75 = arith.addf %71, %74 : vector<1x8xf32>
    %c0_57 = arith.constant 0 : index
    %c0_58 = arith.constant 0 : index
    %c0_59 = arith.constant 0 : index
    %76 = vector.load %arg5[%c0_57, %c0_58, %c0_59] : memref<1x1x8xf32, #tpu.memory_space<vmem>>, vector<1x1x8xf32>
    %77 = vector.shape_cast %76 : vector<1x1x8xf32> to vector<1x8xf32>
    %78 = vector.shape_cast %75 : vector<1x8xf32> to vector<1x1x8xf32>
    tpu.vector_store %arg5[%c0_57, %c0_58, %c0_59], %78 {strides = array<i32>} : memref<1x1x8xf32, #tpu.memory_space<vmem>>, vector<1x1x8xf32>,
    return
  }
  func.func @transform_0(%arg0: i32, %arg1: i32) -> (i32, i32, i32, i32) {
    %c0_i32 = arith.constant 0 : i32
    %c0_i32_0 = arith.constant 0 : i32
    %c0_i32_1 = arith.constant 0 : i32
    %c0_i32_2 = arith.constant 0 : i32
    return %arg0, %c0_i32, %c0_i32_0, %c0_i32_1 : i32, i32, i32, i32
  }
  func.func @transform_1(%arg0: i32, %arg1: i32) -> (i32, i32) {
    %c0_i32 = arith.constant 0 : i32
    %c0_i32_0 = arith.constant 0 : i32
    %c0_i32_1 = arith.constant 0 : i32
    return %c0_i32, %c0_i32_0 : i32, i32
  }
  func.func @transform_2(%arg0: i32, %arg1: i32) -> (i32, i32, i32) {
    %c0_i32 = arith.constant 0 : i32
    %c0_i32_0 = arith.constant 0 : i32
    %c0_i32_1 = arith.constant 0 : i32
    return %arg0, %c0_i32, %c0_i32_0 : i32, i32, i32
  }
  func.func @transform_3(%arg0: i32, %arg1: i32) -> (i32, i32, i32) {
    %c0_i32 = arith.constant 0 : i32
    %c0_i32_0 = arith.constant 0 : i32
    %c0_i32_1 = arith.constant 0 : i32
    return %arg0, %c0_i32, %c0_i32_0 : i32, i32, i32
  }
}

</mosaic_0001>

<llo_original>
// kernel: tpu_custom_call.1
$region0: #{tpu_custom_call.1}
  #allocation0 [shape = 'u32[]', space=smem, size = 0x4, offset = 0x4, fixed_abs, tag = 'smem constant byte address 0x4 - core index']
  #allocation1 [shape = 'u32[144,128]{1,0:T(1,128)}', space=vmem, size = 0x12000, scoped, tag = 'internal scratch']
  #allocation2 [shape = 'bf16[128,36]{1,0:T(16,128)(2,1)}', space=vmem, size = 0x8000, scoped, tag = 'scratch operand']
  %s0 = inlined_call_operand.vmem [shape: bf16[2,18,18,4], index: 0, kind: input, shape index: {}]
  %s1 = inlined_call_operand.vmem [shape: bf16[36,128], index: 1, kind: input, shape index: {}]
  %s2 = inlined_call_operand.hbm [shape: f32[2,1,8], index: 2, kind: output, shape index: {0}]
  %s3 = inlined_call_operand.hbm [shape: f32[2,1,8], index: 3, kind: output, shape index: {1}]
  %4 = xla_tuple %s2, %s3
  %s5 = sld [smem:[#allocation0]]
  $region53: #{tpu_custom_call.1} parent=0
    _
  %s7 = ssub.s32 1, %s5
  %s8 = scalar_select 0, %s7, %s5
  $region1: #{tpu_custom_call.1} parent=0
    #allocation3 [shape = 'u8[1024]{0}', space=vmem, size = 0x400, scoped, tag = 'output window, operand 0']
    #allocation4 [shape = 's32[2]{0}', space=sflag, size = 0x8, scoped, tag = 'scoped memory for tpu_custom_call.1']
    #allocation5 [shape = 'u8[1024]{0}', space=vmem, size = 0x400, scoped, tag = 'output window, operand 1']
    #allocation6 [shape = 's32[2]{0}', space=sflag, size = 0x8, scoped, tag = 'scoped memory for tpu_custom_call.1']
    %9 = vsyncpa [#allocation4], 0
    %s10 = scalar_lea.sflag [#allocation4], 1
    %11 = vsyncpa %s10, 0
    %12 = vsyncpa [#allocation6], 0
    %s13 = scalar_lea.sflag [#allocation6], 1
    %14 = vsyncpa %s13, 0
    loop: start=0, step=1, limit=6
    $region2: #{tpu_custom_call.1} parent=1 // loop_pre_header
      _
    $region3: #{tpu_custom_call.1} parent=1 // loop_header
      %s16 = sphi 0, %s20
      %p17 = scmp.ge.s32.totalorder %s16, 6
      %s23 = sphi 0, %s35
      %s24 = sphi 0, %s31
      %s25 = sphi 0, %s23
      %s26 = sphi 0, %s24
      %s27 = sphi 0, %s25
      %s28 = sphi 0, %s26
      %s38 = sphi 0, %s40
      %s41 = sphi 0, %s38
      %s42 = sphi 0, %s41
      %s58 = sphi 0, %s42
      %s62 = sphi 0, %s62
      %s64 = sphi 0, %s62
      %s65 = sphi 0, %s64
      %s79 = sphi 0, %s65
      %s85 = sphi 0, %s87
      %s88 = sphi 0, %s85
      %s89 = sphi 0, %s88
      %s105 = sphi 0, %s89
      %s111 = sphi 0, %s113
      %s114 = sphi 0, %s111
      %s115 = sphi 0, %s114
      %s131 = sphi 0, %s115
    $region4: #{tpu_custom_call.1} parent=1 // loop_header_branch
      %19 = sbr.rel (%p17) target = $region8
    $region5: #{tpu_custom_call.1} parent=1 // loop_body
      %s21 = ssub.s32 %s16, 1
      %s22 = ssub.s32 %s16, 2
      %s29 = sadd.s32 1, %s24
      %p30 = scmp.ge.s32.totalorder %s29, 2
      %s31 = scalar_select %p30, 0, %s29
      %s32 = sadd.s32 1, %s23
      %s33 = scalar_select %p30, %s32, %s23
      %p34 = scmp.ge.s32.totalorder %s33, 2
      %s35 = scalar_select %p34, 0, %s33
      %s36 = ssub.s32 %s23, %s35
      %p37 = scmp.eq.s32.totalorder %s36, 0
      %s39 = sadd.s32 %s38, 1
      %s40 = scalar_select %p37, %s38, %s39
      %p43 = pneg %p37
      %p44 = scmp.eq.s32.totalorder %s16, 3
      %p45 = por %p43, %p44
      %p46 = scmp.ne.s32.totalorder %s38, %s41
      %p47 = scmp.eq.s32.totalorder %s16, 0
      %p48 = por %p46, %p47
      %p49 = scmp.ne.s32.totalorder %s38, %s41
      %p50 = scmp.eq.s32.totalorder %s21, 3
      %p51 = por %p49, %p50
      %p52 = scmp.ne.s32.totalorder %s41, %s42
      %p53 = scmp.eq.s32.totalorder %s21, 0
      %p54 = por %p52, %p53
      %p55 = scmp.ne.s32.totalorder %s41, %s42
      %p56 = scmp.eq.s32.totalorder %s22, 3
      %p57 = por %p55, %p56
      %p59 = scmp.ne.s32.totalorder %s42, %s58
      %p60 = scmp.eq.s32.totalorder %s22, 0
      %p61 = por %p59, %p60
      %s63 = sadd.s32 %s62, 1
      %p66 = scmp.eq.s32.totalorder %s16, 3
      %p67 = scmp.ne.s32.totalorder %s62, %s64
      %p68 = scmp.eq.s32.totalorder %s16, 0
      %p69 = por %p67, %p68
      %p70 = scmp.ne.s32.totalorder %s62, %s64
      %p71 = scmp.eq.s32.totalorder %s21, 3
      %p72 = por %p70, %p71
      %p73 = scmp.ne.s32.totalorder %s64, %s65
      %p74 = scmp.eq.s32.totalorder %s21, 0
      %p75 = por %p73, %p74
      %p76 = scmp.ne.s32.totalorder %s64, %s65
      %p77 = scmp.eq.s32.totalorder %s22, 3
      %p78 = por %p76, %p77
      %p80 = scmp.ne.s32.totalorder %s65, %s79
      %p81 = scmp.eq.s32.totalorder %s22, 0
      %p82 = por %p80, %p81
      %s83 = ssub.s32 %s23, %s35
      %p84 = scmp.eq.s32.totalorder %s83, 0
      %s86 = sadd.s32 %s85, 1
      %s87 = scalar_select %p84, %s85, %s86
      %p90 = pneg %p84
      %p91 = scmp.eq.s32.totalorder %s16, 3
      %p92 = por %p90, %p91
      %p93 = scmp.ne.s32.totalorder %s85, %s88
      %p94 = scmp.eq.s32.totalorder %s16, 0
      %p95 = por %p93, %p94
      %p96 = scmp.ne.s32.totalorder %s85, %s88
      %p97 = scmp.eq.s32.totalorder %s21, 3
      %p98 = por %p96, %p97
      %p99 = scmp.ne.s32.totalorder %s88, %s89
      %p100 = scmp.eq.s32.totalorder %s21, 0
      %p101 = por %p99, %p100
      %p102 = scmp.ne.s32.totalorder %s88, %s89
      %p103 = scmp.eq.s32.totalorder %s22, 3
      %p104 = por %p102, %p103
      %p106 = scmp.ne.s32.totalorder %s89, %s105
      %p107 = scmp.eq.s32.totalorder %s22, 0
      %p108 = por %p106, %p107
      %s109 = ssub.s32 %s23, %s35
      %p110 = scmp.eq.s32.totalorder %s109, 0
      %s112 = sadd.s32 %s111, 1
      %s113 = scalar_select %p110, %s111, %s112
      %p116 = pneg %p110
      %p117 = scmp.eq.s32.totalorder %s16, 3
      %p118 = por %p116, %p117
      %p119 = scmp.ne.s32.totalorder %s111, %s114
      %p120 = scmp.eq.s32.totalorder %s16, 0
      %p121 = por %p119, %p120
      %p122 = scmp.ne.s32.totalorder %s111, %s114
      %p123 = scmp.eq.s32.totalorder %s21, 3
      %p124 = por %p122, %p123
      %p125 = scmp.ne.s32.totalorder %s114, %s115
      %p126 = scmp.eq.s32.totalorder %s21, 0
      %p127 = por %p125, %p126
      %p128 = scmp.ne.s32.totalorder %s114, %s115
      %p129 = scmp.eq.s32.totalorder %s22, 3
      %p130 = por %p128, %p129
      %p132 = scmp.ne.s32.totalorder %s115, %s131
      %p133 = scmp.eq.s32.totalorder %s22, 0
      %p134 = por %p132, %p133
      %p135 = scmp.le.s32.totalorder 1, %s16
      %p136 = scmp.lt.s32.totalorder %s16, 5
      %p137 = pnand %p135, %p136
      %p138 = pneg %p137
      // Predicated region
      $region9: #{tpu_custom_call.1} parent=5 // pred_check
        _
      $region10: #{tpu_custom_call.1} parent=5 // pred_check_branch
        %140 = sbr.rel (%p137) target = $region12
      $region11: #{tpu_custom_call.1} parent=5 // pred_region
        %s141 = ssub.s32 %s16, 1
        // Predicated region
        $region13: #{tpu_custom_call.1} parent=11 // pred_check
          %p142 = pneg %p75
        $region14: #{tpu_custom_call.1} parent=11 // pred_check_branch
          %144 = sbr.rel (%p142) target = $region16
        $region15: #{tpu_custom_call.1} parent=11 // pred_region
          _
        $region16: #{tpu_custom_call.1} parent=11 // pred_fallthru
          _
      $region12: #{tpu_custom_call.1} parent=5 // pred_fallthru
        _
      %p145 = scmp.lt.s32.totalorder %s16, 4
      // Predicated region
      $region17: #{tpu_custom_call.1} parent=5 // pred_check
        %p146 = pneg %p145
      $region18: #{tpu_custom_call.1} parent=5 // pred_check_branch
        %148 = sbr.rel (%p146) target = $region20
      $region19: #{tpu_custom_call.1} parent=5 // pred_region
        // Predicated region
        $region21: #{tpu_custom_call.1} parent=19 // pred_check
          %p149 = pneg %p48
        $region22: #{tpu_custom_call.1} parent=19 // pred_check_branch
          %151 = sbr.rel (%p149) target = $region24
        $region23: #{tpu_custom_call.1} parent=19 // pred_region
          %p152 = scmp.lt.s32.totalorder %s23, 1
          %s153 = scalar_select %p152, %s23, 1
          %s154 = smul.addr %s153, 54
          %s155 = smul.addr %s154, 4
          %s156 = scalar_lea.vmem %s0, %s155
        $region24: #{tpu_custom_call.1} parent=19 // pred_fallthru
          _
      $region20: #{tpu_custom_call.1} parent=5 // pred_fallthru
        _
      %p157 = scmp.le.s32.totalorder 1, %s16
      %p158 = scmp.lt.s32.totalorder %s16, 5
      %p159 = pnand %p157, %p158
      %p160 = pneg %p159
      // Predicated region
      $region25: #{tpu_custom_call.1} parent=5 // pred_check
        _
      $region26: #{tpu_custom_call.1} parent=5 // pred_check_branch
        %162 = sbr.rel (%p159) target = $region28
      $region27: #{tpu_custom_call.1} parent=5 // pred_region
        %s163 = ssub.s32 %s16, 1
        %p164 = scmp.lt.s32.totalorder %s25, 1
        %s165 = scalar_select %p164, %s25, 1
        %s166 = smul.addr %s165, 54
        %s167 = smul.addr %s166, 4
        %s168 = scalar_lea.vmem %s0, %s167
        %p169 = pneg %p54
        %p170 = pneg %p51
        %p171 = pneg %p75
        %p172 = pneg %p72
        %p173 = pneg %p101
        %p174 = pneg %p98
        %s175 = sand.u32 %s88, 1
        %s176 = scalar_lea.sflag [#allocation4], %s175
        %s177 = sand.u32 %s88, 1
        %s178 = scalar_lea.vmem [#allocation3], %s177
        %p179 = pneg %p127
        %p180 = pneg %p124
        %s181 = sand.u32 %s114, 1
        %s182 = scalar_lea.sflag [#allocation6], %s181
        %s183 = sand.u32 %s114, 1
        %s184 = scalar_lea.vmem [#allocation5], %s183
        %p185 = scmp.lt.s32.totalorder %s25, 1
        %s186 = scalar_select %p185, %s25, 1
        %s187 = smul.addr %s186, 54
        %s188 = smul.addr %s187, 4
        %s189 = scalar_lea.vmem %s0, %s188
        %p191 = scmp.eq.s32.totalorder %s26, 0
        // Predicated region
        $region29: #{tpu_custom_call.1} parent=27 // pred_check
          %p192 = pneg %p191
        $region30: #{tpu_custom_call.1} parent=27 // pred_check_branch
          %194 = sbr.rel (%p192) target = $region32
        $region31: #{tpu_custom_call.1} parent=27 // pred_region
          %vm195 = vcmask 57344
          %196 = vst.msk [vmem:[%s178] sm:$0x1] %vm195, 0.0
          %197 = vst.msk [vmem:[%s184] sm:$0x1] %vm195, 0.0
        $region32: #{tpu_custom_call.1} parent=27 // pred_fallthru
          _
        %s198 = smul.u32 %s26, 8
        %s199 = smul.u32 %s198, 3
        %s200 = smul.addr %s199, 4
        %s201 = scalar_lea.vmem %s189, %s200
        %v202 = vld [vmem:[%s201] sm:$0xf]
        %v203 = vld [vmem:[%s201 + $0x4] sm:$0xf]
        %v204 = vld [vmem:[%s201 + $0xc] sm:$0xf]
        %v205 = vld [vmem:[%s201 + $0x10] sm:$0xf]
        %v206 = vld [vmem:[%s201 + $0x18] sm:$0xf]
        %v207 = vld [vmem:[%s201 + $0x1c] sm:$0xf]
        %v208 = vld [vmem:[%s201 + $0x24] sm:$0xf]
        %v209 = vld [vmem:[%s201 + $0x28] sm:$0xf]
        %v210 = vld [vmem:[%s201 + $0x30] sm:$0xf]
        %v211 = vld [vmem:[%s201 + $0x34] sm:$0xf]
        %v212 = vld [vmem:[%s201 + $0x3c] sm:$0xf]
        %v213 = vld [vmem:[%s201 + $0x40] sm:$0xf]
        %v214 = vld [vmem:[%s201 + $0x48] sm:$0xf]
        %v215 = vld [vmem:[%s201 + $0x4c] sm:$0xf]
        %v216 = vld [vmem:[%s201 + $0x54] sm:$0xf]
        %v217 = vld [vmem:[%s201 + $0x58] sm:$0xf]
        %v234 = vunpack.c.l.b16 %v202
        %v235 = vunpack.c.l.b16 %v203
        %v236 = vunpack.c.l.b16 %v204
        %v237 = vunpack.c.l.b16 %v205
        %v238 = vunpack.c.l.b16 %v206
        %v239 = vunpack.c.l.b16 %v207
        %v240 = vunpack.c.l.b16 %v208
        %v241 = vunpack.c.l.b16 %v209
        %v242 = vunpack.c.l.b16 %v210
        %v243 = vunpack.c.l.b16 %v211
        %v244 = vunpack.c.l.b16 %v212
        %v245 = vunpack.c.l.b16 %v213
        %v246 = vunpack.c.l.b16 %v214
        %v247 = vunpack.c.l.b16 %v215
        %v248 = vunpack.c.l.b16 %v216
        %v249 = vunpack.c.l.b16 %v217
        %v250 = vpack.c.b16 %v235, %v234
        %v251 = vpack.c.b16 %v237, %v236
        %v252 = vpack.c.b16 %v239, %v238
        %v253 = vpack.c.b16 %v241, %v240
        %v254 = vpack.c.b16 %v243, %v242
        %v255 = vpack.c.b16 %v245, %v244
        %v256 = vpack.c.b16 %v247, %v246
        %v257 = vpack.c.b16 %v249, %v248
        %vm266 = vcmask 31744
        %267 = vst.msk [vmem:[#allocation2] sm:$0xff] %vm266, %v250
        %268 = vst.msk [vmem:[#allocation2 + $0x8] sm:$0xff] %vm266, %v251
        %269 = vst.msk [vmem:[#allocation2 + $0x10] sm:$0xff] %vm266, %v252
        %270 = vst.msk [vmem:[#allocation2 + $0x18] sm:$0xff] %vm266, %v253
        %271 = vst.msk [vmem:[#allocation2 + $0x20] sm:$0xff] %vm266, %v254
        %272 = vst.msk [vmem:[#allocation2 + $0x28] sm:$0xff] %vm266, %v255
        %273 = vst.msk [vmem:[#allocation2 + $0x30] sm:$0xff] %vm266, %v256
        %274 = vst.msk [vmem:[#allocation2 + $0x38] sm:$0xff] %vm266, %v257
        %v275 = vld [vmem:[%s201] sm:$0xf]
        %v276 = vld [vmem:[%s201 + $0x4] sm:$0xf]
        %v277 = vld [vmem:[%s201 + $0x8] sm:$0x1]
        %v278 = vld [vmem:[%s201 + $0xc] sm:$0xf]
        %v279 = vld [vmem:[%s201 + $0x10] sm:$0xf]
        %v280 = vld [vmem:[%s201 + $0x14] sm:$0x1]
        %v281 = vld [vmem:[%s201 + $0x18] sm:$0xf]
        %v282 = vld [vmem:[%s201 + $0x1c] sm:$0xf]
        %v283 = vld [vmem:[%s201 + $0x20] sm:$0x1]
        %v284 = vld [vmem:[%s201 + $0x24] sm:$0xf]
        %v285 = vld [vmem:[%s201 + $0x28] sm:$0xf]
        %v286 = vld [vmem:[%s201 + $0x2c] sm:$0x1]
        %v287 = vld [vmem:[%s201 + $0x30] sm:$0xf]
        %v288 = vld [vmem:[%s201 + $0x34] sm:$0xf]
        %v289 = vld [vmem:[%s201 + $0x38] sm:$0x1]
        %v290 = vld [vmem:[%s201 + $0x3c] sm:$0xf]
        %v291 = vld [vmem:[%s201 + $0x40] sm:$0xf]
        %v292 = vld [vmem:[%s201 + $0x44] sm:$0x1]
        %v293 = vld [vmem:[%s201 + $0x48] sm:$0xf]
        %v294 = vld [vmem:[%s201 + $0x4c] sm:$0xf]
        %v295 = vld [vmem:[%s201 + $0x50] sm:$0x1]
        %v296 = vld [vmem:[%s201 + $0x54] sm:$0xf]
        %v297 = vld [vmem:[%s201 + $0x58] sm:$0xf]
        %v298 = vld [vmem:[%s201 + $0x5c] sm:$0x1]
        %vm299 = vsmask.f32 3328
        %vm300 = vsmask.f32 7440
        %vm301 = vmor %vm299, %vm300
        %v303 = vshrl.u32 %v275, 16
        %v305 = vrot.slane %v303, 4
        %v306 = vshll.u32 %v275, 16
        %v308 = vrot.slane %v306, 5
        %v309 = vor.u32 %v305, %v308
        %v310 = vrot.slane %v309, 4
        %v312 = vshll.u32 %v276, 16
        %v314 = vrot.slane %v312, 5
        %v315 = vsel %vm301, %v310, %v314
        %v316 = vshrl.u32 %v276, 16
        %v318 = vrot.slane %v316, 4
        %v319 = vor.u32 %v318, %v314
        %v320 = vrot.slane %v319, 4
        %v322 = vshll.u32 %v277, 16
        %v324 = vrot.slane %v322, 5
        %v325 = vsel %vm301, %v320, %v324
        %v327 = vshrl.u32 %v278, 16
        %v329 = vrot.slane %v327, 4
        %v330 = vshll.u32 %v278, 16
        %v332 = vrot.slane %v330, 5
        %v333 = vor.u32 %v329, %v332
        %v334 = vrot.slane %v333, 4
        %v336 = vshll.u32 %v279, 16
        %v338 = vrot.slane %v336, 5
        %v339 = vsel %vm301, %v334, %v338
        %v340 = vshrl.u32 %v279, 16
        %v342 = vrot.slane %v340, 4
        %v343 = vor.u32 %v342, %v338
        %v344 = vrot.slane %v343, 4
        %v346 = vshll.u32 %v280, 16
        %v348 = vrot.slane %v346, 5
        %v349 = vsel %vm301, %v344, %v348
        %v351 = vshrl.u32 %v281, 16
        %v353 = vrot.slane %v351, 4
        %v354 = vshll.u32 %v281, 16
        %v356 = vrot.slane %v354, 5
        %v357 = vor.u32 %v353, %v356
        %v358 = vrot.slane %v357, 4
        %v360 = vshll.u32 %v282, 16
        %v362 = vrot.slane %v360, 5
        %v363 = vsel %vm301, %v358, %v362
        %v364 = vshrl.u32 %v282, 16
        %v366 = vrot.slane %v364, 4
        %v367 = vor.u32 %v366, %v362
        %v368 = vrot.slane %v367, 4
        %v370 = vshll.u32 %v283, 16
        %v372 = vrot.slane %v370, 5
        %v373 = vsel %vm301, %v368, %v372
        %v375 = vshrl.u32 %v284, 16
        %v377 = vrot.slane %v375, 4
        %v378 = vshll.u32 %v284, 16
        %v380 = vrot.slane %v378, 5
        %v381 = vor.u32 %v377, %v380
        %v382 = vrot.slane %v381, 4
        %v384 = vshll.u32 %v285, 16
        %v386 = vrot.slane %v384, 5
        %v387 = vsel %vm301, %v382, %v386
        %v388 = vshrl.u32 %v285, 16
        %v390 = vrot.slane %v388, 4
        %v391 = vor.u32 %v390, %v386
        %v392 = vrot.slane %v391, 4
        %v394 = vshll.u32 %v286, 16
        %v396 = vrot.slane %v394, 5
        %v397 = vsel %vm301, %v392, %v396
        %v399 = vshrl.u32 %v287, 16
        %v401 = vrot.slane %v399, 4
        %v402 = vshll.u32 %v287, 16
        %v404 = vrot.slane %v402, 5
        %v405 = vor.u32 %v401, %v404
        %v406 = vrot.slane %v405, 4
        %v408 = vshll.u32 %v288, 16
        %v410 = vrot.slane %v408, 5
        %v411 = vsel %vm301, %v406, %v410
        %v412 = vshrl.u32 %v288, 16
        %v414 = vrot.slane %v412, 4
        %v415 = vor.u32 %v414, %v410
        %v416 = vrot.slane %v415, 4
        %v418 = vshll.u32 %v289, 16
        %v420 = vrot.slane %v418, 5
        %v421 = vsel %vm301, %v416, %v420
        %v423 = vshrl.u32 %v290, 16
        %v425 = vrot.slane %v423, 4
        %v426 = vshll.u32 %v290, 16
        %v428 = vrot.slane %v426, 5
        %v429 = vor.u32 %v425, %v428
        %v430 = vrot.slane %v429, 4
        %v432 = vshll.u32 %v291, 16
        %v434 = vrot.slane %v432, 5
        %v435 = vsel %vm301, %v430, %v434
        %v436 = vshrl.u32 %v291, 16
        %v438 = vrot.slane %v436, 4
        %v439 = vor.u32 %v438, %v434
        %v440 = vrot.slane %v439, 4
        %v442 = vshll.u32 %v292, 16
        %v444 = vrot.slane %v442, 5
        %v445 = vsel %vm301, %v440, %v444
        %v447 = vshrl.u32 %v293, 16
        %v449 = vrot.slane %v447, 4
        %v450 = vshll.u32 %v293, 16
        %v452 = vrot.slane %v450, 5
        %v453 = vor.u32 %v449, %v452
        %v454 = vrot.slane %v453, 4
        %v456 = vshll.u32 %v294, 16
        %v458 = vrot.slane %v456, 5
        %v459 = vsel %vm301, %v454, %v458
        %v460 = vshrl.u32 %v294, 16
        %v462 = vrot.slane %v460, 4
        %v463 = vor.u32 %v462, %v458
        %v464 = vrot.slane %v463, 4
        %v466 = vshll.u32 %v295, 16
        %v468 = vrot.slane %v466, 5
        %v469 = vsel %vm301, %v464, %v468
        %v471 = vshrl.u32 %v296, 16
        %v473 = vrot.slane %v471, 4
        %v474 = vshll.u32 %v296, 16
        %v476 = vrot.slane %v474, 5
        %v477 = vor.u32 %v473, %v476
        %v478 = vrot.slane %v477, 4
        %v480 = vshll.u32 %v297, 16
        %v482 = vrot.slane %v480, 5
        %v483 = vsel %vm301, %v478, %v482
        %v484 = vshrl.u32 %v297, 16
        %v486 = vrot.slane %v484, 4
        %v487 = vor.u32 %v486, %v482
        %v488 = vrot.slane %v487, 4
        %v490 = vshll.u32 %v298, 16
        %v492 = vrot.slane %v490, 5
        %v493 = vsel %vm301, %v488, %v492
        %v494 = vunpack.c.l.b16 %v315
        %v495 = vunpack.c.l.b16 %v325
        %v496 = vunpack.c.l.b16 %v339
        %v497 = vunpack.c.l.b16 %v349
        %v498 = vunpack.c.l.b16 %v363
        %v499 = vunpack.c.l.b16 %v373
        %v500 = vunpack.c.l.b16 %v387
        %v501 = vunpack.c.l.b16 %v397
        %v502 = vunpack.c.l.b16 %v411
        %v503 = vunpack.c.l.b16 %v421
        %v504 = vunpack.c.l.b16 %v435
        %v505 = vunpack.c.l.b16 %v445
        %v506 = vunpack.c.l.b16 %v459
        %v507 = vunpack.c.l.b16 %v469
        %v508 = vunpack.c.l.b16 %v483
        %v509 = vunpack.c.l.b16 %v493
        %v510 = vpack.c.b16 %v495, %v494
        %v511 = vpack.c.b16 %v497, %v496
        %v512 = vpack.c.b16 %v499, %v498
        %v513 = vpack.c.b16 %v501, %v500
        %v514 = vpack.c.b16 %v503, %v502
        %v515 = vpack.c.b16 %v505, %v504
        %v516 = vpack.c.b16 %v507, %v506
        %v517 = vpack.c.b16 %v509, %v508
        %518 = vrot.lane.b32.xlu0 %v510, 4
        %v519 = vpop.permute.xlu0 %518
        %520 = vrot.lane.b32.xlu0 %v511, 4
        %v521 = vpop.permute.xlu0 %520
        %522 = vrot.lane.b32.xlu0 %v512, 4
        %v523 = vpop.permute.xlu0 %522
        %524 = vrot.lane.b32.xlu0 %v513, 4
        %v525 = vpop.permute.xlu0 %524
        %526 = vrot.lane.b32.xlu0 %v514, 4
        %v527 = vpop.permute.xlu0 %526
        %528 = vrot.lane.b32.xlu0 %v515, 4
        %v529 = vpop.permute.xlu0 %528
        %530 = vrot.lane.b32.xlu0 %v516, 4
        %v531 = vpop.permute.xlu0 %530
        %532 = vrot.lane.b32.xlu0 %v517, 4
        %v533 = vpop.permute.xlu0 %532
        %vm542 = vcmask 64544
        %543 = vst.msk [vmem:[#allocation2] sm:$0xff] %vm542, %v519
        %544 = vst.msk [vmem:[#allocation2 + $0x8] sm:$0xff] %vm542, %v521
        %545 = vst.msk [vmem:[#allocation2 + $0x10] sm:$0xff] %vm542, %v523
        %546 = vst.msk [vmem:[#allocation2 + $0x18] sm:$0xff] %vm542, %v525
        %547 = vst.msk [vmem:[#allocation2 + $0x20] sm:$0xff] %vm542, %v527
        %548 = vst.msk [vmem:[#allocation2 + $0x28] sm:$0xff] %vm542, %v529
        %549 = vst.msk [vmem:[#allocation2 + $0x30] sm:$0xff] %vm542, %v531
        %550 = vst.msk [vmem:[#allocation2 + $0x38] sm:$0xff] %vm542, %v533
        %v551 = vld [vmem:[%s201] sm:$0xe]
        %v552 = vld [vmem:[%s201 + $0x4] sm:$0xf]
        %v553 = vld [vmem:[%s201 + $0x8] sm:$0x1]
        %v554 = vld [vmem:[%s201 + $0xc] sm:$0xe]
        %v555 = vld [vmem:[%s201 + $0x10] sm:$0xf]
        %v556 = vld [vmem:[%s201 + $0x14] sm:$0x1]
        %v557 = vld [vmem:[%s201 + $0x18] sm:$0xe]
        %v558 = vld [vmem:[%s201 + $0x1c] sm:$0xf]
        %v559 = vld [vmem:[%s201 + $0x20] sm:$0x1]
        %v560 = vld [vmem:[%s201 + $0x24] sm:$0xe]
        %v561 = vld [vmem:[%s201 + $0x28] sm:$0xf]
        %v562 = vld [vmem:[%s201 + $0x2c] sm:$0x1]
        %v563 = vld [vmem:[%s201 + $0x30] sm:$0xe]
        %v564 = vld [vmem:[%s201 + $0x34] sm:$0xf]
        %v565 = vld [vmem:[%s201 + $0x38] sm:$0x1]
        %v566 = vld [vmem:[%s201 + $0x3c] sm:$0xe]
        %v567 = vld [vmem:[%s201 + $0x40] sm:$0xf]
        %v568 = vld [vmem:[%s201 + $0x44] sm:$0x1]
        %v569 = vld [vmem:[%s201 + $0x48] sm:$0xe]
        %v570 = vld [vmem:[%s201 + $0x4c] sm:$0xf]
        %v571 = vld [vmem:[%s201 + $0x50] sm:$0x1]
        %v572 = vld [vmem:[%s201 + $0x54] sm:$0xe]
        %v573 = vld [vmem:[%s201 + $0x58] sm:$0xf]
        %v574 = vld [vmem:[%s201 + $0x5c] sm:$0x1]
        %vm599 = vcmask 1042432
        %vm600 = vcmask 1046532
        %vm601 = vmor %vm599, %vm600
        %v602 = vrot.slane %v551, 5
        %v603 = vrot.slane %v602, 4
        %v604 = vrot.slane %v552, 5
        %v605 = vsel %vm601, %v603, %v604
        %v606 = vrot.slane %v604, 4
        %v607 = vrot.slane %v553, 5
        %v608 = vsel %vm601, %v606, %v607
        %v609 = vrot.slane %v554, 5
        %v610 = vrot.slane %v609, 4
        %v611 = vrot.slane %v555, 5
        %v612 = vsel %vm601, %v610, %v611
        %v613 = vrot.slane %v611, 4
        %v614 = vrot.slane %v556, 5
        %v615 = vsel %vm601, %v613, %v614
        %v616 = vrot.slane %v557, 5
        %v617 = vrot.slane %v616, 4
        %v618 = vrot.slane %v558, 5
        %v619 = vsel %vm601, %v617, %v618
        %v620 = vrot.slane %v618, 4
        %v621 = vrot.slane %v559, 5
        %v622 = vsel %vm601, %v620, %v621
        %v623 = vrot.slane %v560, 5
        %v624 = vrot.slane %v623, 4
        %v625 = vrot.slane %v561, 5
        %v626 = vsel %vm601, %v624, %v625
        %v627 = vrot.slane %v625, 4
        %v628 = vrot.slane %v562, 5
        %v629 = vsel %vm601, %v627, %v628
        %v630 = vrot.slane %v563, 5
        %v631 = vrot.slane %v630, 4
        %v632 = vrot.slane %v564, 5
        %v633 = vsel %vm601, %v631, %v632
        %v634 = vrot.slane %v632, 4
        %v635 = vrot.slane %v565, 5
        %v636 = vsel %vm601, %v634, %v635
        %v637 = vrot.slane %v566, 5
        %v638 = vrot.slane %v637, 4
        %v639 = vrot.slane %v567, 5
        %v640 = vsel %vm601, %v638, %v639
        %v641 = vrot.slane %v639, 4
        %v642 = vrot.slane %v568, 5
        %v643 = vsel %vm601, %v641, %v642
        %v644 = vrot.slane %v569, 5
        %v645 = vrot.slane %v644, 4
        %v646 = vrot.slane %v570, 5
        %v647 = vsel %vm601, %v645, %v646
        %v648 = vrot.slane %v646, 4
        %v649 = vrot.slane %v571, 5
        %v650 = vsel %vm601, %v648, %v649
        %v651 = vrot.slane %v572, 5
        %v652 = vrot.slane %v651, 4
        %v653 = vrot.slane %v573, 5
        %v654 = vsel %vm601, %v652, %v653
        %v655 = vrot.slane %v653, 4
        %v656 = vrot.slane %v574, 5
        %v657 = vsel %vm601, %v655, %v656
        %v658 = vunpack.c.l.b16 %v605
        %v659 = vunpack.c.l.b16 %v608
        %v660 = vunpack.c.l.b16 %v612
        %v661 = vunpack.c.l.b16 %v615
        %v662 = vunpack.c.l.b16 %v619
        %v663 = vunpack.c.l.b16 %v622
        %v664 = vunpack.c.l.b16 %v626
        %v665 = vunpack.c.l.b16 %v629
        %v666 = vunpack.c.l.b16 %v633
        %v667 = vunpack.c.l.b16 %v636
        %v668 = vunpack.c.l.b16 %v640
        %v669 = vunpack.c.l.b16 %v643
        %v670 = vunpack.c.l.b16 %v647
        %v671 = vunpack.c.l.b16 %v650
        %v672 = vunpack.c.l.b16 %v654
        %v673 = vunpack.c.l.b16 %v657
        %v674 = vpack.c.b16 %v659, %v658
        %v675 = vpack.c.b16 %v661, %v660
        %v676 = vpack.c.b16 %v663, %v662
        %v677 = vpack.c.b16 %v665, %v664
        %v678 = vpack.c.b16 %v667, %v666
        %v679 = vpack.c.b16 %v669, %v668
        %v680 = vpack.c.b16 %v671, %v670
        %v681 = vpack.c.b16 %v673, %v672
        %682 = vrot.lane.b32.xlu0 %v674, 8
        %v683 = vpop.permute.xlu0 %682
        %684 = vrot.lane.b32.xlu0 %v675, 8
        %v685 = vpop.permute.xlu0 %684
        %686 = vrot.lane.b32.xlu0 %v676, 8
        %v687 = vpop.permute.xlu0 %686
        %688 = vrot.lane.b32.xlu0 %v677, 8
        %v689 = vpop.permute.xlu0 %688
        %690 = vrot.lane.b32.xlu0 %v678, 8
        %v691 = vpop.permute.xlu0 %690
        %692 = vrot.lane.b32.xlu0 %v679, 8
        %v693 = vpop.permute.xlu0 %692
        %694 = vrot.lane.b32.xlu0 %v680, 8
        %v695 = vpop.permute.xlu0 %694
        %696 = vrot.lane.b32.xlu0 %v681, 8
        %v697 = vpop.permute.xlu0 %696
        %vm706 = vcmask 97344
        %707 = vst.msk [vmem:[#allocation2] sm:$0xff] %vm706, %v683
        %708 = vst.msk [vmem:[#allocation2 + $0x8] sm:$0xff] %vm706, %v685
        %709 = vst.msk [vmem:[#allocation2 + $0x10] sm:$0xff] %vm706, %v687
        %710 = vst.msk [vmem:[#allocation2 + $0x18] sm:$0xff] %vm706, %v689
        %711 = vst.msk [vmem:[#allocation2 + $0x20] sm:$0xff] %vm706, %v691
        %712 = vst.msk [vmem:[#allocation2 + $0x28] sm:$0xff] %vm706, %v693
        %713 = vst.msk [vmem:[#allocation2 + $0x30] sm:$0xff] %vm706, %v695
        %714 = vst.msk [vmem:[#allocation2 + $0x38] sm:$0xff] %vm706, %v697
        %s715 = sadd.s32 %s198, 1
        %s716 = smul.u32 %s715, 3
        %s717 = smul.addr %s716, 4
        %s718 = scalar_lea.vmem %s189, %s717
        %v719 = vld [vmem:[%s718] sm:$0xf]
        %v720 = vld [vmem:[%s718 + $0x4] sm:$0xf]
        %v721 = vld [vmem:[%s718 + $0xc] sm:$0xf]
        %v722 = vld [vmem:[%s718 + $0x10] sm:$0xf]
        %v723 = vld [vmem:[%s718 + $0x18] sm:$0xf]
        %v724 = vld [vmem:[%s718 + $0x1c] sm:$0xf]
        %v725 = vld [vmem:[%s718 + $0x24] sm:$0xf]
        %v726 = vld [vmem:[%s718 + $0x28] sm:$0xf]
        %v727 = vld [vmem:[%s718 + $0x30] sm:$0xf]
        %v728 = vld [vmem:[%s718 + $0x34] sm:$0xf]
        %v729 = vld [vmem:[%s718 + $0x3c] sm:$0xf]
        %v730 = vld [vmem:[%s718 + $0x40] sm:$0xf]
        %v731 = vld [vmem:[%s718 + $0x48] sm:$0xf]
        %v732 = vld [vmem:[%s718 + $0x4c] sm:$0xf]
        %v733 = vld [vmem:[%s718 + $0x54] sm:$0xf]
        %v734 = vld [vmem:[%s718 + $0x58] sm:$0xf]
        %v751 = vunpack.c.l.b16 %v719
        %v752 = vunpack.c.l.b16 %v720
        %v753 = vunpack.c.l.b16 %v721
        %v754 = vunpack.c.l.b16 %v722
        %v755 = vunpack.c.l.b16 %v723
        %v756 = vunpack.c.l.b16 %v724
        %v757 = vunpack.c.l.b16 %v725
        %v758 = vunpack.c.l.b16 %v726
        %v759 = vunpack.c.l.b16 %v727
        %v760 = vunpack.c.l.b16 %v728
        %v761 = vunpack.c.l.b16 %v729
        %v762 = vunpack.c.l.b16 %v730
        %v763 = vunpack.c.l.b16 %v731
        %v764 = vunpack.c.l.b16 %v732
        %v765 = vunpack.c.l.b16 %v733
        %v766 = vunpack.c.l.b16 %v734
        %v767 = vpack.c.b16 %v752, %v751
        %v768 = vpack.c.b16 %v754, %v753
        %v769 = vpack.c.b16 %v756, %v755
        %v770 = vpack.c.b16 %v758, %v757
        %v771 = vpack.c.b16 %v760, %v759
        %v772 = vpack.c.b16 %v762, %v761
        %v773 = vpack.c.b16 %v764, %v763
        %v774 = vpack.c.b16 %v766, %v765
        %775 = vrot.lane.b32.xlu0 %v767, 12
        %v776 = vpop.permute.xlu0 %775
        %777 = vrot.lane.b32.xlu0 %v768, 12
        %v778 = vpop.permute.xlu0 %777
        %779 = vrot.lane.b32.xlu0 %v769, 12
        %v780 = vpop.permute.xlu0 %779
        %781 = vrot.lane.b32.xlu0 %v770, 12
        %v782 = vpop.permute.xlu0 %781
        %783 = vrot.lane.b32.xlu0 %v771, 12
        %v784 = vpop.permute.xlu0 %783
        %785 = vrot.lane.b32.xlu0 %v772, 12
        %v786 = vpop.permute.xlu0 %785
        %787 = vrot.lane.b32.xlu0 %v773, 12
        %v788 = vpop.permute.xlu0 %787
        %789 = vrot.lane.b32.xlu0 %v774, 12
        %v790 = vpop.permute.xlu0 %789
        %vm799 = vcmask 130144
        %800 = vst.msk [vmem:[#allocation2] sm:$0xff] %vm799, %v776
        %801 = vst.msk [vmem:[#allocation2 + $0x8] sm:$0xff] %vm799, %v778
        %802 = vst.msk [vmem:[#allocation2 + $0x10] sm:$0xff] %vm799, %v780
        %803 = vst.msk [vmem:[#allocation2 + $0x18] sm:$0xff] %vm799, %v782
        %804 = vst.msk [vmem:[#allocation2 + $0x20] sm:$0xff] %vm799, %v784
        %805 = vst.msk [vmem:[#allocation2 + $0x28] sm:$0xff] %vm799, %v786
        %806 = vst.msk [vmem:[#allocation2 + $0x30] sm:$0xff] %vm799, %v788
        %807 = vst.msk [vmem:[#allocation2 + $0x38] sm:$0xff] %vm799, %v790
        %v808 = vld [vmem:[%s718] sm:$0xf]
        %v809 = vld [vmem:[%s718 + $0x4] sm:$0xf]
        %v810 = vld [vmem:[%s718 + $0x8] sm:$0x1]
        %v811 = vld [vmem:[%s718 + $0xc] sm:$0xf]
        %v812 = vld [vmem:[%s718 + $0x10] sm:$0xf]
        %v813 = vld [vmem:[%s718 + $0x14] sm:$0x1]
        %v814 = vld [vmem:[%s718 + $0x18] sm:$0xf]
        %v815 = vld [vmem:[%s718 + $0x1c] sm:$0xf]
        %v816 = vld [vmem:[%s718 + $0x20] sm:$0x1]
        %v817 = vld [vmem:[%s718 + $0x24] sm:$0xf]
        %v818 = vld [vmem:[%s718 + $0x28] sm:$0xf]
        %v819 = vld [vmem:[%s718 + $0x2c] sm:$0x1]
        %v820 = vld [vmem:[%s718 + $0x30] sm:$0xf]
        %v821 = vld [vmem:[%s718 + $0x34] sm:$0xf]
        %v822 = vld [vmem:[%s718 + $0x38] sm:$0x1]
        %v823 = vld [vmem:[%s718 + $0x3c] sm:$0xf]
        %v824 = vld [vmem:[%s718 + $0x40] sm:$0xf]
        %v825 = vld [vmem:[%s718 + $0x44] sm:$0x1]
        %v826 = vld [vmem:[%s718 + $0x48] sm:$0xf]
        %v827 = vld [vmem:[%s718 + $0x4c] sm:$0xf]
        %v828 = vld [vmem:[%s718 + $0x50] sm:$0x1]
        %v829 = vld [vmem:[%s718 + $0x54] sm:$0xf]
        %v830 = vld [vmem:[%s718 + $0x58] sm:$0xf]
        %v831 = vld [vmem:[%s718 + $0x5c] sm:$0x1]
        %v833 = vshrl.u32 %v808, 16
        %v835 = vrot.slane %v833, 4
        %v836 = vshll.u32 %v808, 16
        %v838 = vrot.slane %v836, 5
        %v839 = vor.u32 %v835, %v838
        %v840 = vrot.slane %v839, 4
        %v842 = vshll.u32 %v809, 16
        %v844 = vrot.slane %v842, 5
        %v845 = vsel %vm301, %v840, %v844
        %v846 = vshrl.u32 %v809, 16
        %v848 = vrot.slane %v846, 4
        %v849 = vor.u32 %v848, %v844
        %v850 = vrot.slane %v849, 4
        %v852 = vshll.u32 %v810, 16
        %v854 = vrot.slane %v852, 5
        %v855 = vsel %vm301, %v850, %v854
        %v857 = vshrl.u32 %v811, 16
        %v859 = vrot.slane %v857, 4
        %v860 = vshll.u32 %v811, 16
        %v862 = vrot.slane %v860, 5
        %v863 = vor.u32 %v859, %v862
        %v864 = vrot.slane %v863, 4
        %v866 = vshll.u32 %v812, 16
        %v868 = vrot.slane %v866, 5
        %v869 = vsel %vm301, %v864, %v868
        %v870 = vshrl.u32 %v812, 16
        %v872 = vrot.slane %v870, 4
        %v873 = vor.u32 %v872, %v868
        %v874 = vrot.slane %v873, 4
        %v876 = vshll.u32 %v813, 16
        %v878 = vrot.slane %v876, 5
        %v879 = vsel %vm301, %v874, %v878
        %v881 = vshrl.u32 %v814, 16
        %v883 = vrot.slane %v881, 4
        %v884 = vshll.u32 %v814, 16
        %v886 = vrot.slane %v884, 5
        %v887 = vor.u32 %v883, %v886
        %v888 = vrot.slane %v887, 4
        %v890 = vshll.u32 %v815, 16
        %v892 = vrot.slane %v890, 5
        %v893 = vsel %vm301, %v888, %v892
        %v894 = vshrl.u32 %v815, 16
        %v896 = vrot.slane %v894, 4
        %v897 = vor.u32 %v896, %v892
        %v898 = vrot.slane %v897, 4
        %v900 = vshll.u32 %v816, 16
        %v902 = vrot.slane %v900, 5
        %v903 = vsel %vm301, %v898, %v902
        %v905 = vshrl.u32 %v817, 16
        %v907 = vrot.slane %v905, 4
        %v908 = vshll.u32 %v817, 16
        %v910 = vrot.slane %v908, 5
        %v911 = vor.u32 %v907, %v910
        %v912 = vrot.slane %v911, 4
        %v914 = vshll.u32 %v818, 16
        %v916 = vrot.slane %v914, 5
        %v917 = vsel %vm301, %v912, %v916
        %v918 = vshrl.u32 %v818, 16
        %v920 = vrot.slane %v918, 4
        %v921 = vor.u32 %v920, %v916
        %v922 = vrot.slane %v921, 4
        %v924 = vshll.u32 %v819, 16
        %v926 = vrot.slane %v924, 5
        %v927 = vsel %vm301, %v922, %v926
        %v929 = vshrl.u32 %v820, 16
        %v931 = vrot.slane %v929, 4
        %v932 = vshll.u32 %v820, 16
        %v934 = vrot.slane %v932, 5
        %v935 = vor.u32 %v931, %v934
        %v936 = vrot.slane %v935, 4
        %v938 = vshll.u32 %v821, 16
        %v940 = vrot.slane %v938, 5
        %v941 = vsel %vm301, %v936, %v940
        %v942 = vshrl.u32 %v821, 16
        %v944 = vrot.slane %v942, 4
        %v945 = vor.u32 %v944, %v940
        %v946 = vrot.slane %v945, 4
        %v948 = vshll.u32 %v822, 16
        %v950 = vrot.slane %v948, 5
        %v951 = vsel %vm301, %v946, %v950
        %v953 = vshrl.u32 %v823, 16
        %v955 = vrot.slane %v953, 4
        %v956 = vshll.u32 %v823, 16
        %v958 = vrot.slane %v956, 5
        %v959 = vor.u32 %v955, %v958
        %v960 = vrot.slane %v959, 4
        %v962 = vshll.u32 %v824, 16
        %v964 = vrot.slane %v962, 5
        %v965 = vsel %vm301, %v960, %v964
        %v966 = vshrl.u32 %v824, 16
        %v968 = vrot.slane %v966, 4
        %v969 = vor.u32 %v968, %v964
        %v970 = vrot.slane %v969, 4
        %v972 = vshll.u32 %v825, 16
        %v974 = vrot.slane %v972, 5
        %v975 = vsel %vm301, %v970, %v974
        %v977 = vshrl.u32 %v826, 16
        %v979 = vrot.slane %v977, 4
        %v980 = vshll.u32 %v826, 16
        %v982 = vrot.slane %v980, 5
        %v983 = vor.u32 %v979, %v982
        %v984 = vrot.slane %v983, 4
        %v986 = vshll.u32 %v827, 16
        %v988 = vrot.slane %v986, 5
        %v989 = vsel %vm301, %v984, %v988
        %v990 = vshrl.u32 %v827, 16
        %v992 = vrot.slane %v990, 4
        %v993 = vor.u32 %v992, %v988
        %v994 = vrot.slane %v993, 4
        %v996 = vshll.u32 %v828, 16
        %v998 = vrot.slane %v996, 5
        %v999 = vsel %vm301, %v994, %v998
        %v1001 = vshrl.u32 %v829, 16
        %v1003 = vrot.slane %v1001, 4
        %v1004 = vshll.u32 %v829, 16
        %v1006 = vrot.slane %v1004, 5
        %v1007 = vor.u32 %v1003, %v1006
        %v1008 = vrot.slane %v1007, 4
        %v1010 = vshll.u32 %v830, 16
        %v1012 = vrot.slane %v1010, 5
        %v1013 = vsel %vm301, %v1008, %v1012
        %v1014 = vshrl.u32 %v830, 16
        %v1016 = vrot.slane %v1014, 4
        %v1017 = vor.u32 %v1016, %v1012
        %v1018 = vrot.slane %v1017, 4
        %v1020 = vshll.u32 %v831, 16
        %v1022 = vrot.slane %v1020, 5
        %v1023 = vsel %vm301, %v1018, %v1022
        %v1024 = vunpack.c.l.b16 %v845
        %v1025 = vunpack.c.l.b16 %v855
        %v1026 = vunpack.c.l.b16 %v869
        %v1027 = vunpack.c.l.b16 %v879
        %v1028 = vunpack.c.l.b16 %v893
        %v1029 = vunpack.c.l.b16 %v903
        %v1030 = vunpack.c.l.b16 %v917
        %v1031 = vunpack.c.l.b16 %v927
        %v1032 = vunpack.c.l.b16 %v941
        %v1033 = vunpack.c.l.b16 %v951
        %v1034 = vunpack.c.l.b16 %v965
        %v1035 = vunpack.c.l.b16 %v975
        %v1036 = vunpack.c.l.b16 %v989
        %v1037 = vunpack.c.l.b16 %v999
        %v1038 = vunpack.c.l.b16 %v1013
        %v1039 = vunpack.c.l.b16 %v1023
        %v1040 = vpack.c.b16 %v1025, %v1024
        %v1041 = vpack.c.b16 %v1027, %v1026
        %v1042 = vpack.c.b16 %v1029, %v1028
        %v1043 = vpack.c.b16 %v1031, %v1030
        %v1044 = vpack.c.b16 %v1033, %v1032
        %v1045 = vpack.c.b16 %v1035, %v1034
        %v1046 = vpack.c.b16 %v1037, %v1036
        %v1047 = vpack.c.b16 %v1039, %v1038
        %1048 = vrot.lane.b32.xlu0 %v1040, 16
        %v1049 = vpop.permute.xlu0 %1048
        %1050 = vrot.lane.b32.xlu0 %v1041, 16
        %v1051 = vpop.permute.xlu0 %1050
        %1052 = vrot.lane.b32.xlu0 %v1042, 16
        %v1053 = vpop.permute.xlu0 %1052
        %1054 = vrot.lane.b32.xlu0 %v1043, 16
        %v1055 = vpop.permute.xlu0 %1054
        %1056 = vrot.lane.b32.xlu0 %v1044, 16
        %v1057 = vpop.permute.xlu0 %1056
        %1058 = vrot.lane.b32.xlu0 %v1045, 16
        %v1059 = vpop.permute.xlu0 %1058
        %1060 = vrot.lane.b32.xlu0 %v1046, 16
        %v1061 = vpop.permute.xlu0 %1060
        %1062 = vrot.lane.b32.xlu0 %v1047, 16
        %v1063 = vpop.permute.xlu0 %1062
        %vm1072 = vcmask 162944
        %1073 = vst.msk [vmem:[#allocation2] sm:$0xff] %vm1072, %v1049
        %1074 = vst.msk [vmem:[#allocation2 + $0x8] sm:$0xff] %vm1072, %v1051
        %1075 = vst.msk [vmem:[#allocation2 + $0x10] sm:$0xff] %vm1072, %v1053
        %1076 = vst.msk [vmem:[#allocation2 + $0x18] sm:$0xff] %vm1072, %v1055
        %1077 = vst.msk [vmem:[#allocation2 + $0x20] sm:$0xff] %vm1072, %v1057
        %1078 = vst.msk [vmem:[#allocation2 + $0x28] sm:$0xff] %vm1072, %v1059
        %1079 = vst.msk [vmem:[#allocation2 + $0x30] sm:$0xff] %vm1072, %v1061
        %1080 = vst.msk [vmem:[#allocation2 + $0x38] sm:$0xff] %vm1072, %v1063
        %v1081 = vld [vmem:[%s718] sm:$0xe]
        %v1082 = vld [vmem:[%s718 + $0x4] sm:$0xf]
        %v1083 = vld [vmem:[%s718 + $0x8] sm:$0x1]
        %v1084 = vld [vmem:[%s718 + $0xc] sm:$0xe]
        %v1085 = vld [vmem:[%s718 + $0x10] sm:$0xf]
        %v1086 = vld [vmem:[%s718 + $0x14] sm:$0x1]
        %v1087 = vld [vmem:[%s718 + $0x18] sm:$0xe]
        %v1088 = vld [vmem:[%s718 + $0x1c] sm:$0xf]
        %v1089 = vld [vmem:[%s718 + $0x20] sm:$0x1]
        %v1090 = vld [vmem:[%s718 + $0x24] sm:$0xe]
        %v1091 = vld [vmem:[%s718 + $0x28] sm:$0xf]
        %v1092 = vld [vmem:[%s718 + $0x2c] sm:$0x1]
        %v1093 = vld [vmem:[%s718 + $0x30] sm:$0xe]
        %v1094 = vld [vmem:[%s718 + $0x34] sm:$0xf]
        %v1095 = vld [vmem:[%s718 + $0x38] sm:$0x1]
        %v1096 = vld [vmem:[%s718 + $0x3c] sm:$0xe]
        %v1097 = vld [vmem:[%s718 + $0x40] sm:$0xf]
        %v1098 = vld [vmem:[%s718 + $0x44] sm:$0x1]
        %v1099 = vld [vmem:[%s718 + $0x48] sm:$0xe]
        %v1100 = vld [vmem:[%s718 + $0x4c] sm:$0xf]
        %v1101 = vld [vmem:[%s718 + $0x50] sm:$0x1]
        %v1102 = vld [vmem:[%s718 + $0x54] sm:$0xe]
        %v1103 = vld [vmem:[%s718 + $0x58] sm:$0xf]
        %v1104 = vld [vmem:[%s718 + $0x5c] sm:$0x1]
        %v1129 = vrot.slane %v1081, 5
        %v1130 = vrot.slane %v1129, 4
        %v1131 = vrot.slane %v1082, 5
        %v1132 = vsel %vm601, %v1130, %v1131
        %v1133 = vrot.slane %v1131, 4
        %v1134 = vrot.slane %v1083, 5
        %v1135 = vsel %vm601, %v1133, %v1134
        %v1136 = vrot.slane %v1084, 5
        %v1137 = vrot.slane %v1136, 4
        %v1138 = vrot.slane %v1085, 5
        %v1139 = vsel %vm601, %v1137, %v1138
        %v1140 = vrot.slane %v1138, 4
        %v1141 = vrot.slane %v1086, 5
        %v1142 = vsel %vm601, %v1140, %v1141
        %v1143 = vrot.slane %v1087, 5
        %v1144 = vrot.slane %v1143, 4
        %v1145 = vrot.slane %v1088, 5
        %v1146 = vsel %vm601, %v1144, %v1145
        %v1147 = vrot.slane %v1145, 4
        %v1148 = vrot.slane %v1089, 5
        %v1149 = vsel %vm601, %v1147, %v1148
        %v1150 = vrot.slane %v1090, 5
        %v1151 = vrot.slane %v1150, 4
        %v1152 = vrot.slane %v1091, 5
        %v1153 = vsel %vm601, %v1151, %v1152
        %v1154 = vrot.slane %v1152, 4
        %v1155 = vrot.slane %v1092, 5
        %v1156 = vsel %vm601, %v1154, %v1155
        %v1157 = vrot.slane %v1093, 5
        %v1158 = vrot.slane %v1157, 4
        %v1159 = vrot.slane %v1094, 5
        %v1160 = vsel %vm601, %v1158, %v1159
        %v1161 = vrot.slane %v1159, 4
        %v1162 = vrot.slane %v1095, 5
        %v1163 = vsel %vm601, %v1161, %v1162
        %v1164 = vrot.slane %v1096, 5
        %v1165 = vrot.slane %v1164, 4
        %v1166 = vrot.slane %v1097, 5
        %v1167 = vsel %vm601, %v1165, %v1166
        %v1168 = vrot.slane %v1166, 4
        %v1169 = vrot.slane %v1098, 5
        %v1170 = vsel %vm601, %v1168, %v1169
        %v1171 = vrot.slane %v1099, 5
        %v1172 = vrot.slane %v1171, 4
        %v1173 = vrot.slane %v1100, 5
        %v1174 = vsel %vm601, %v1172, %v1173
        %v1175 = vrot.slane %v1173, 4
        %v1176 = vrot.slane %v1101, 5
        %v1177 = vsel %vm601, %v1175, %v1176
        %v1178 = vrot.slane %v1102, 5
        %v1179 = vrot.slane %v1178, 4
        %v1180 = vrot.slane %v1103, 5
        %v1181 = vsel %vm601, %v1179, %v1180
        %v1182 = vrot.slane %v1180, 4
        %v1183 = vrot.slane %v1104, 5
        %v1184 = vsel %vm601, %v1182, %v1183
        %v1185 = vunpack.c.l.b16 %v1132
        %v1186 = vunpack.c.l.b16 %v1135
        %v1187 = vunpack.c.l.b16 %v1139
        %v1188 = vunpack.c.l.b16 %v1142
        %v1189 = vunpack.c.l.b16 %v1146
        %v1190 = vunpack.c.l.b16 %v1149
        %v1191 = vunpack.c.l.b16 %v1153
        %v1192 = vunpack.c.l.b16 %v1156
        %v1193 = vunpack.c.l.b16 %v1160
        %v1194 = vunpack.c.l.b16 %v1163
        %v1195 = vunpack.c.l.b16 %v1167
        %v1196 = vunpack.c.l.b16 %v1170
        %v1197 = vunpack.c.l.b16 %v1174
        %v1198 = vunpack.c.l.b16 %v1177
        %v1199 = vunpack.c.l.b16 %v1181
        %v1200 = vunpack.c.l.b16 %v1184
        %v1201 = vpack.c.b16 %v1186, %v1185
        %v1202 = vpack.c.b16 %v1188, %v1187
        %v1203 = vpack.c.b16 %v1190, %v1189
        %v1204 = vpack.c.b16 %v1192, %v1191
        %v1205 = vpack.c.b16 %v1194, %v1193
        %v1206 = vpack.c.b16 %v1196, %v1195
        %v1207 = vpack.c.b16 %v1198, %v1197
        %v1208 = vpack.c.b16 %v1200, %v1199
        %1209 = vrot.lane.b32.xlu0 %v1201, 20
        %v1210 = vpop.permute.xlu0 %1209
        %1211 = vrot.lane.b32.xlu0 %v1202, 20
        %v1212 = vpop.permute.xlu0 %1211
        %1213 = vrot.lane.b32.xlu0 %v1203, 20
        %v1214 = vpop.permute.xlu0 %1213
        %1215 = vrot.lane.b32.xlu0 %v1204, 20
        %v1216 = vpop.permute.xlu0 %1215
        %1217 = vrot.lane.b32.xlu0 %v1205, 20
        %v1218 = vpop.permute.xlu0 %1217
        %1219 = vrot.lane.b32.xlu0 %v1206, 20
        %v1220 = vpop.permute.xlu0 %1219
        %1221 = vrot.lane.b32.xlu0 %v1207, 20
        %v1222 = vpop.permute.xlu0 %1221
        %1223 = vrot.lane.b32.xlu0 %v1208, 20
        %v1224 = vpop.permute.xlu0 %1223
        %vm1233 = vcmask 195744
        %1234 = vst.msk [vmem:[#allocation2] sm:$0xff] %vm1233, %v1210
        %1235 = vst.msk [vmem:[#allocation2 + $0x8] sm:$0xff] %vm1233, %v1212
        %1236 = vst.msk [vmem:[#allocation2 + $0x10] sm:$0xff] %vm1233, %v1214
        %1237 = vst.msk [vmem:[#allocation2 + $0x18] sm:$0xff] %vm1233, %v1216
        %1238 = vst.msk [vmem:[#allocation2 + $0x20] sm:$0xff] %vm1233, %v1218
        %1239 = vst.msk [vmem:[#allocation2 + $0x28] sm:$0xff] %vm1233, %v1220
        %1240 = vst.msk [vmem:[#allocation2 + $0x30] sm:$0xff] %vm1233, %v1222
        %1241 = vst.msk [vmem:[#allocation2 + $0x38] sm:$0xff] %vm1233, %v1224
        %s1242 = sadd.s32 %s198, 2
        %s1243 = smul.u32 %s1242, 3
        %s1244 = smul.addr %s1243, 4
        %s1245 = scalar_lea.vmem %s189, %s1244
        %v1246 = vld [vmem:[%s1245] sm:$0xf]
        %v1247 = vld [vmem:[%s1245 + $0x4] sm:$0xf]
        %v1248 = vld [vmem:[%s1245 + $0xc] sm:$0xf]
        %v1249 = vld [vmem:[%s1245 + $0x10] sm:$0xf]
        %v1250 = vld [vmem:[%s1245 + $0x18] sm:$0xf]
        %v1251 = vld [vmem:[%s1245 + $0x1c] sm:$0xf]
        %v1252 = vld [vmem:[%s1245 + $0x24] sm:$0xf]
        %v1253 = vld [vmem:[%s1245 + $0x28] sm:$0xf]
        %v1254 = vld [vmem:[%s1245 + $0x30] sm:$0xf]
        %v1255 = vld [vmem:[%s1245 + $0x34] sm:$0xf]
        %v1256 = vld [vmem:[%s1245 + $0x3c] sm:$0xf]
        %v1257 = vld [vmem:[%s1245 + $0x40] sm:$0xf]
        %v1258 = vld [vmem:[%s1245 + $0x48] sm:$0xf]
        %v1259 = vld [vmem:[%s1245 + $0x4c] sm:$0xf]
        %v1260 = vld [vmem:[%s1245 + $0x54] sm:$0xf]
        %v1261 = vld [vmem:[%s1245 + $0x58] sm:$0xf]
        %v1278 = vunpack.c.l.b16 %v1246
        %v1279 = vunpack.c.l.b16 %v1247
        %v1280 = vunpack.c.l.b16 %v1248
        %v1281 = vunpack.c.l.b16 %v1249
        %v1282 = vunpack.c.l.b16 %v1250
        %v1283 = vunpack.c.l.b16 %v1251
        %v1284 = vunpack.c.l.b16 %v1252
        %v1285 = vunpack.c.l.b16 %v1253
        %v1286 = vunpack.c.l.b16 %v1254
        %v1287 = vunpack.c.l.b16 %v1255
        %v1288 = vunpack.c.l.b16 %v1256
        %v1289 = vunpack.c.l.b16 %v1257
        %v1290 = vunpack.c.l.b16 %v1258
        %v1291 = vunpack.c.l.b16 %v1259
        %v1292 = vunpack.c.l.b16 %v1260
        %v1293 = vunpack.c.l.b16 %v1261
        %v1294 = vpack.c.b16 %v1279, %v1278
        %v1295 = vpack.c.b16 %v1281, %v1280
        %v1296 = vpack.c.b16 %v1283, %v1282
        %v1297 = vpack.c.b16 %v1285, %v1284
        %v1298 = vpack.c.b16 %v1287, %v1286
        %v1299 = vpack.c.b16 %v1289, %v1288
        %v1300 = vpack.c.b16 %v1291, %v1290
        %v1301 = vpack.c.b16 %v1293, %v1292
        %1302 = vrot.lane.b32.xlu0 %v1294, 24
        %v1303 = vpop.permute.xlu0 %1302
        %1304 = vrot.lane.b32.xlu0 %v1295, 24
        %v1305 = vpop.permute.xlu0 %1304
        %1306 = vrot.lane.b32.xlu0 %v1296, 24
        %v1307 = vpop.permute.xlu0 %1306
        %1308 = vrot.lane.b32.xlu0 %v1297, 24
        %v1309 = vpop.permute.xlu0 %1308
        %1310 = vrot.lane.b32.xlu0 %v1298, 24
        %v1311 = vpop.permute.xlu0 %1310
        %1312 = vrot.lane.b32.xlu0 %v1299, 24
        %v1313 = vpop.permute.xlu0 %1312
        %1314 = vrot.lane.b32.xlu0 %v1300, 24
        %v1315 = vpop.permute.xlu0 %1314
        %1316 = vrot.lane.b32.xlu0 %v1301, 24
        %v1317 = vpop.permute.xlu0 %1316
        %vm1326 = vcmask 228544
        %1327 = vst.msk [vmem:[#allocation2] sm:$0xff] %vm1326, %v1303
        %1328 = vst.msk [vmem:[#allocation2 + $0x8] sm:$0xff] %vm1326, %v1305
        %1329 = vst.msk [vmem:[#allocation2 + $0x10] sm:$0xff] %vm1326, %v1307
        %1330 = vst.msk [vmem:[#allocation2 + $0x18] sm:$0xff] %vm1326, %v1309
        %1331 = vst.msk [vmem:[#allocation2 + $0x20] sm:$0xff] %vm1326, %v1311
        %1332 = vst.msk [vmem:[#allocation2 + $0x28] sm:$0xff] %vm1326, %v1313
        %1333 = vst.msk [vmem:[#allocation2 + $0x30] sm:$0xff] %vm1326, %v1315
        %1334 = vst.msk [vmem:[#allocation2 + $0x38] sm:$0xff] %vm1326, %v1317
        %v1335 = vld [vmem:[%s1245] sm:$0xf]
        %v1336 = vld [vmem:[%s1245 + $0x4] sm:$0xf]
        %v1337 = vld [vmem:[%s1245 + $0x8] sm:$0x1]
        %v1338 = vld [vmem:[%s1245 + $0xc] sm:$0xf]
        %v1339 = vld [vmem:[%s1245 + $0x10] sm:$0xf]
        %v1340 = vld [vmem:[%s1245 + $0x14] sm:$0x1]
        %v1341 = vld [vmem:[%s1245 + $0x18] sm:$0xf]
        %v1342 = vld [vmem:[%s1245 + $0x1c] sm:$0xf]
        %v1343 = vld [vmem:[%s1245 + $0x20] sm:$0x1]
        %v1344 = vld [vmem:[%s1245 + $0x24] sm:$0xf]
        %v1345 = vld [vmem:[%s1245 + $0x28] sm:$0xf]
        %v1346 = vld [vmem:[%s1245 + $0x2c] sm:$0x1]
        %v1347 = vld [vmem:[%s1245 + $0x30] sm:$0xf]
        %v1348 = vld [vmem:[%s1245 + $0x34] sm:$0xf]
        %v1349 = vld [vmem:[%s1245 + $0x38] sm:$0x1]
        %v1350 = vld [vmem:[%s1245 + $0x3c] sm:$0xf]
        %v1351 = vld [vmem:[%s1245 + $0x40] sm:$0xf]
        %v1352 = vld [vmem:[%s1245 + $0x44] sm:$0x1]
        %v1353 = vld [vmem:[%s1245 + $0x48] sm:$0xf]
        %v1354 = vld [vmem:[%s1245 + $0x4c] sm:$0xf]
        %v1355 = vld [vmem:[%s1245 + $0x50] sm:$0x1]
        %v1356 = vld [vmem:[%s1245 + $0x54] sm:$0xf]
        %v1357 = vld [vmem:[%s1245 + $0x58] sm:$0xf]
        %v1358 = vld [vmem:[%s1245 + $0x5c] sm:$0x1]
        %v1360 = vshrl.u32 %v1335, 16
        %v1362 = vrot.slane %v1360, 4
        %v1363 = vshll.u32 %v1335, 16
        %v1365 = vrot.slane %v1363, 5
        %v1366 = vor.u32 %v1362, %v1365
        %v1367 = vrot.slane %v1366, 4
        %v1369 = vshll.u32 %v1336, 16
        %v1371 = vrot.slane %v1369, 5
        %v1372 = vsel %vm301, %v1367, %v1371
        %v1373 = vshrl.u32 %v1336, 16
        %v1375 = vrot.slane %v1373, 4
        %v1376 = vor.u32 %v1375, %v1371
        %v1377 = vrot.slane %v1376, 4
        %v1379 = vshll.u32 %v1337, 16
        %v1381 = vrot.slane %v1379, 5
        %v1382 = vsel %vm301, %v1377, %v1381
        %v1384 = vshrl.u32 %v1338, 16
        %v1386 = vrot.slane %v1384, 4
        %v1387 = vshll.u32 %v1338, 16
        %v1389 = vrot.slane %v1387, 5
        %v1390 = vor.u32 %v1386, %v1389
        %v1391 = vrot.slane %v1390, 4
        %v1393 = vshll.u32 %v1339, 16
        %v1395 = vrot.slane %v1393, 5
        %v1396 = vsel %vm301, %v1391, %v1395
        %v1397 = vshrl.u32 %v1339, 16
        %v1399 = vrot.slane %v1397, 4
        %v1400 = vor.u32 %v1399, %v1395
        %v1401 = vrot.slane %v1400, 4
        %v1403 = vshll.u32 %v1340, 16
        %v1405 = vrot.slane %v1403, 5
        %v1406 = vsel %vm301, %v1401, %v1405
        %v1408 = vshrl.u32 %v1341, 16
        %v1410 = vrot.slane %v1408, 4
        %v1411 = vshll.u32 %v1341, 16
        %v1413 = vrot.slane %v1411, 5
        %v1414 = vor.u32 %v1410, %v1413
        %v1415 = vrot.slane %v1414, 4
        %v1417 = vshll.u32 %v1342, 16
        %v1419 = vrot.slane %v1417, 5
        %v1420 = vsel %vm301, %v1415, %v1419
        %v1421 = vshrl.u32 %v1342, 16
        %v1423 = vrot.slane %v1421, 4
        %v1424 = vor.u32 %v1423, %v1419
        %v1425 = vrot.slane %v1424, 4
        %v1427 = vshll.u32 %v1343, 16
        %v1429 = vrot.slane %v1427, 5
        %v1430 = vsel %vm301, %v1425, %v1429
        %v1432 = vshrl.u32 %v1344, 16
        %v1434 = vrot.slane %v1432, 4
        %v1435 = vshll.u32 %v1344, 16
        %v1437 = vrot.slane %v1435, 5
        %v1438 = vor.u32 %v1434, %v1437
        %v1439 = vrot.slane %v1438, 4
        %v1441 = vshll.u32 %v1345, 16
        %v1443 = vrot.slane %v1441, 5
        %v1444 = vsel %vm301, %v1439, %v1443
        %v1445 = vshrl.u32 %v1345, 16
        %v1447 = vrot.slane %v1445, 4
        %v1448 = vor.u32 %v1447, %v1443
        %v1449 = vrot.slane %v1448, 4
        %v1451 = vshll.u32 %v1346, 16
        %v1453 = vrot.slane %v1451, 5
        %v1454 = vsel %vm301, %v1449, %v1453
        %v1456 = vshrl.u32 %v1347, 16
        %v1458 = vrot.slane %v1456, 4
        %v1459 = vshll.u32 %v1347, 16
        %v1461 = vrot.slane %v1459, 5
        %v1462 = vor.u32 %v1458, %v1461
        %v1463 = vrot.slane %v1462, 4
        %v1465 = vshll.u32 %v1348, 16
        %v1467 = vrot.slane %v1465, 5
        %v1468 = vsel %vm301, %v1463, %v1467
        %v1469 = vshrl.u32 %v1348, 16
        %v1471 = vrot.slane %v1469, 4
        %v1472 = vor.u32 %v1471, %v1467
        %v1473 = vrot.slane %v1472, 4
        %v1475 = vshll.u32 %v1349, 16
        %v1477 = vrot.slane %v1475, 5
        %v1478 = vsel %vm301, %v1473, %v1477
        %v1480 = vshrl.u32 %v1350, 16
        %v1482 = vrot.slane %v1480, 4
        %v1483 = vshll.u32 %v1350, 16
        %v1485 = vrot.slane %v1483, 5
        %v1486 = vor.u32 %v1482, %v1485
        %v1487 = vrot.slane %v1486, 4
        %v1489 = vshll.u32 %v1351, 16
        %v1491 = vrot.slane %v1489, 5
        %v1492 = vsel %vm301, %v1487, %v1491
        %v1493 = vshrl.u32 %v1351, 16
        %v1495 = vrot.slane %v1493, 4
        %v1496 = vor.u32 %v1495, %v1491
        %v1497 = vrot.slane %v1496, 4
        %v1499 = vshll.u32 %v1352, 16
        %v1501 = vrot.slane %v1499, 5
        %v1502 = vsel %vm301, %v1497, %v1501
        %v1504 = vshrl.u32 %v1353, 16
        %v1506 = vrot.slane %v1504, 4
        %v1507 = vshll.u32 %v1353, 16
        %v1509 = vrot.slane %v1507, 5
        %v1510 = vor.u32 %v1506, %v1509
        %v1511 = vrot.slane %v1510, 4
        %v1513 = vshll.u32 %v1354, 16
        %v1515 = vrot.slane %v1513, 5
        %v1516 = vsel %vm301, %v1511, %v1515
        %v1517 = vshrl.u32 %v1354, 16
        %v1519 = vrot.slane %v1517, 4
        %v1520 = vor.u32 %v1519, %v1515
        %v1521 = vrot.slane %v1520, 4
        %v1523 = vshll.u32 %v1355, 16
        %v1525 = vrot.slane %v1523, 5
        %v1526 = vsel %vm301, %v1521, %v1525
        %v1528 = vshrl.u32 %v1356, 16
        %v1530 = vrot.slane %v1528, 4
        %v1531 = vshll.u32 %v1356, 16
        %v1533 = vrot.slane %v1531, 5
        %v1534 = vor.u32 %v1530, %v1533
        %v1535 = vrot.slane %v1534, 4
        %v1537 = vshll.u32 %v1357, 16
        %v1539 = vrot.slane %v1537, 5
        %v1540 = vsel %vm301, %v1535, %v1539
        %v1541 = vshrl.u32 %v1357, 16
        %v1543 = vrot.slane %v1541, 4
        %v1544 = vor.u32 %v1543, %v1539
        %v1545 = vrot.slane %v1544, 4
        %v1547 = vshll.u32 %v1358, 16
        %v1549 = vrot.slane %v1547, 5
        %v1550 = vsel %vm301, %v1545, %v1549
        %v1551 = vunpack.c.l.b16 %v1372
        %v1552 = vunpack.c.l.b16 %v1382
        %v1553 = vunpack.c.l.b16 %v1396
        %v1554 = vunpack.c.l.b16 %v1406
        %v1555 = vunpack.c.l.b16 %v1420
        %v1556 = vunpack.c.l.b16 %v1430
        %v1557 = vunpack.c.l.b16 %v1444
        %v1558 = vunpack.c.l.b16 %v1454
        %v1559 = vunpack.c.l.b16 %v1468
        %v1560 = vunpack.c.l.b16 %v1478
        %v1561 = vunpack.c.l.b16 %v1492
        %v1562 = vunpack.c.l.b16 %v1502
        %v1563 = vunpack.c.l.b16 %v1516
        %v1564 = vunpack.c.l.b16 %v1526
        %v1565 = vunpack.c.l.b16 %v1540
        %v1566 = vunpack.c.l.b16 %v1550
        %v1567 = vpack.c.b16 %v1552, %v1551
        %v1568 = vpack.c.b16 %v1554, %v1553
        %v1569 = vpack.c.b16 %v1556, %v1555
        %v1570 = vpack.c.b16 %v1558, %v1557
        %v1571 = vpack.c.b16 %v1560, %v1559
        %v1572 = vpack.c.b16 %v1562, %v1561
        %v1573 = vpack.c.b16 %v1564, %v1563
        %v1574 = vpack.c.b16 %v1566, %v1565
        %1575 = vrot.lane.b32.xlu0 %v1567, 28
        %v1576 = vpop.permute.xlu0 %1575
        %1577 = vrot.lane.b32.xlu0 %v1568, 28
        %v1578 = vpop.permute.xlu0 %1577
        %1579 = vrot.lane.b32.xlu0 %v1569, 28
        %v1580 = vpop.permute.xlu0 %1579
        %1581 = vrot.lane.b32.xlu0 %v1570, 28
        %v1582 = vpop.permute.xlu0 %1581
        %1583 = vrot.lane.b32.xlu0 %v1571, 28
        %v1584 = vpop.permute.xlu0 %1583
        %1585 = vrot.lane.b32.xlu0 %v1572, 28
        %v1586 = vpop.permute.xlu0 %1585
        %1587 = vrot.lane.b32.xlu0 %v1573, 28
        %v1588 = vpop.permute.xlu0 %1587
        %1589 = vrot.lane.b32.xlu0 %v1574, 28
        %v1590 = vpop.permute.xlu0 %1589
        %vm1599 = vcmask 261344
        %1600 = vst.msk [vmem:[#allocation2] sm:$0xff] %vm1599, %v1576
        %1601 = vst.msk [vmem:[#allocation2 + $0x8] sm:$0xff] %vm1599, %v1578
        %1602 = vst.msk [vmem:[#allocation2 + $0x10] sm:$0xff] %vm1599, %v1580
        %1603 = vst.msk [vmem:[#allocation2 + $0x18] sm:$0xff] %vm1599, %v1582
        %1604 = vst.msk [vmem:[#allocation2 + $0x20] sm:$0xff] %vm1599, %v1584
        %1605 = vst.msk [vmem:[#allocation2 + $0x28] sm:$0xff] %vm1599, %v1586
        %1606 = vst.msk [vmem:[#allocation2 + $0x30] sm:$0xff] %vm1599, %v1588
        %1607 = vst.msk [vmem:[#allocation2 + $0x38] sm:$0xff] %vm1599, %v1590
        %v1608 = vld [vmem:[%s1245] sm:$0xe]
        %v1609 = vld [vmem:[%s1245 + $0x4] sm:$0xf]
        %v1610 = vld [vmem:[%s1245 + $0x8] sm:$0x1]
        %v1611 = vld [vmem:[%s1245 + $0xc] sm:$0xe]
        %v1612 = vld [vmem:[%s1245 + $0x10] sm:$0xf]
        %v1613 = vld [vmem:[%s1245 + $0x14] sm:$0x1]
        %v1614 = vld [vmem:[%s1245 + $0x18] sm:$0xe]
        %v1615 = vld [vmem:[%s1245 + $0x1c] sm:$0xf]
        %v1616 = vld [vmem:[%s1245 + $0x20] sm:$0x1]
        %v1617 = vld [vmem:[%s1245 + $0x24] sm:$0xe]
        %v1618 = vld [vmem:[%s1245 + $0x28] sm:$0xf]
        %v1619 = vld [vmem:[%s1245 + $0x2c] sm:$0x1]
        %v1620 = vld [vmem:[%s1245 + $0x30] sm:$0xe]
        %v1621 = vld [vmem:[%s1245 + $0x34] sm:$0xf]
        %v1622 = vld [vmem:[%s1245 + $0x38] sm:$0x1]
        %v1623 = vld [vmem:[%s1245 + $0x3c] sm:$0xe]
        %v1624 = vld [vmem:[%s1245 + $0x40] sm:$0xf]
        %v1625 = vld [vmem:[%s1245 + $0x44] sm:$0x1]
        %v1626 = vld [vmem:[%s1245 + $0x48] sm:$0xe]
        %v1627 = vld [vmem:[%s1245 + $0x4c] sm:$0xf]
        %v1628 = vld [vmem:[%s1245 + $0x50] sm:$0x1]
        %v1629 = vld [vmem:[%s1245 + $0x54] sm:$0xe]
        %v1630 = vld [vmem:[%s1245 + $0x58] sm:$0xf]
        %v1631 = vld [vmem:[%s1245 + $0x5c] sm:$0x1]
        %v1656 = vrot.slane %v1608, 5
        %v1657 = vrot.slane %v1656, 4
        %v1658 = vrot.slane %v1609, 5
        %v1659 = vsel %vm601, %v1657, %v1658
        %v1660 = vrot.slane %v1658, 4
        %v1661 = vrot.slane %v1610, 5
        %v1662 = vsel %vm601, %v1660, %v1661
        %v1663 = vrot.slane %v1611, 5
        %v1664 = vrot.slane %v1663, 4
        %v1665 = vrot.slane %v1612, 5
        %v1666 = vsel %vm601, %v1664, %v1665
        %v1667 = vrot.slane %v1665, 4
        %v1668 = vrot.slane %v1613, 5
        %v1669 = vsel %vm601, %v1667, %v1668
        %v1670 = vrot.slane %v1614, 5
        %v1671 = vrot.slane %v1670, 4
        %v1672 = vrot.slane %v1615, 5
        %v1673 = vsel %vm601, %v1671, %v1672
        %v1674 = vrot.slane %v1672, 4
        %v1675 = vrot.slane %v1616, 5
        %v1676 = vsel %vm601, %v1674, %v1675
        %v1677 = vrot.slane %v1617, 5
        %v1678 = vrot.slane %v1677, 4
        %v1679 = vrot.slane %v1618, 5
        %v1680 = vsel %vm601, %v1678, %v1679
        %v1681 = vrot.slane %v1679, 4
        %v1682 = vrot.slane %v1619, 5
        %v1683 = vsel %vm601, %v1681, %v1682
        %v1684 = vrot.slane %v1620, 5
        %v1685 = vrot.slane %v1684, 4
        %v1686 = vrot.slane %v1621, 5
        %v1687 = vsel %vm601, %v1685, %v1686
        %v1688 = vrot.slane %v1686, 4
        %v1689 = vrot.slane %v1622, 5
        %v1690 = vsel %vm601, %v1688, %v1689
        %v1691 = vrot.slane %v1623, 5
        %v1692 = vrot.slane %v1691, 4
        %v1693 = vrot.slane %v1624, 5
        %v1694 = vsel %vm601, %v1692, %v1693
        %v1695 = vrot.slane %v1693, 4
        %v1696 = vrot.slane %v1625, 5
        %v1697 = vsel %vm601, %v1695, %v1696
        %v1698 = vrot.slane %v1626, 5
        %v1699 = vrot.slane %v1698, 4
        %v1700 = vrot.slane %v1627, 5
        %v1701 = vsel %vm601, %v1699, %v1700
        %v1702 = vrot.slane %v1700, 4
        %v1703 = vrot.slane %v1628, 5
        %v1704 = vsel %vm601, %v1702, %v1703
        %v1705 = vrot.slane %v1629, 5
        %v1706 = vrot.slane %v1705, 4
        %v1707 = vrot.slane %v1630, 5
        %v1708 = vsel %vm601, %v1706, %v1707
        %v1709 = vrot.slane %v1707, 4
        %v1710 = vrot.slane %v1631, 5
        %v1711 = vsel %vm601, %v1709, %v1710
        %v1712 = vunpack.c.l.b16 %v1659
        %v1713 = vunpack.c.l.b16 %v1662
        %v1714 = vunpack.c.l.b16 %v1666
        %v1715 = vunpack.c.l.b16 %v1669
        %v1716 = vunpack.c.l.b16 %v1673
        %v1717 = vunpack.c.l.b16 %v1676
        %v1718 = vunpack.c.l.b16 %v1680
        %v1719 = vunpack.c.l.b16 %v1683
        %v1720 = vunpack.c.l.b16 %v1687
        %v1721 = vunpack.c.l.b16 %v1690
        %v1722 = vunpack.c.l.b16 %v1694
        %v1723 = vunpack.c.l.b16 %v1697
        %v1724 = vunpack.c.l.b16 %v1701
        %v1725 = vunpack.c.l.b16 %v1704
        %v1726 = vunpack.c.l.b16 %v1708
        %v1727 = vunpack.c.l.b16 %v1711
        %v1728 = vpack.c.b16 %v1713, %v1712
        %v1729 = vpack.c.b16 %v1715, %v1714
        %v1730 = vpack.c.b16 %v1717, %v1716
        %v1731 = vpack.c.b16 %v1719, %v1718
        %v1732 = vpack.c.b16 %v1721, %v1720
        %v1733 = vpack.c.b16 %v1723, %v1722
        %v1734 = vpack.c.b16 %v1725, %v1724
        %v1735 = vpack.c.b16 %v1727, %v1726
        %1736 = vrot.lane.b32.xlu0 %v1728, 32
        %v1737 = vpop.permute.xlu0 %1736
        %1738 = vrot.lane.b32.xlu0 %v1729, 32
        %v1739 = vpop.permute.xlu0 %1738
        %1740 = vrot.lane.b32.xlu0 %v1730, 32
        %v1741 = vpop.permute.xlu0 %1740
        %1742 = vrot.lane.b32.xlu0 %v1731, 32
        %v1743 = vpop.permute.xlu0 %1742
        %1744 = vrot.lane.b32.xlu0 %v1732, 32
        %v1745 = vpop.permute.xlu0 %1744
        %1746 = vrot.lane.b32.xlu0 %v1733, 32
        %v1747 = vpop.permute.xlu0 %1746
        %1748 = vrot.lane.b32.xlu0 %v1734, 32
        %v1749 = vpop.permute.xlu0 %1748
        %1750 = vrot.lane.b32.xlu0 %v1735, 32
        %v1751 = vpop.permute.xlu0 %1750
        %vm1760 = vcmask 294144
        %1761 = vst.msk [vmem:[#allocation2] sm:$0xff] %vm1760, %v1737
        %1762 = vst.msk [vmem:[#allocation2 + $0x8] sm:$0xff] %vm1760, %v1739
        %1763 = vst.msk [vmem:[#allocation2 + $0x10] sm:$0xff] %vm1760, %v1741
        %1764 = vst.msk [vmem:[#allocation2 + $0x18] sm:$0xff] %vm1760, %v1743
        %1765 = vst.msk [vmem:[#allocation2 + $0x20] sm:$0xff] %vm1760, %v1745
        %1766 = vst.msk [vmem:[#allocation2 + $0x28] sm:$0xff] %vm1760, %v1747
        %1767 = vst.msk [vmem:[#allocation2 + $0x30] sm:$0xff] %vm1760, %v1749
        %1768 = vst.msk [vmem:[#allocation2 + $0x38] sm:$0xff] %vm1760, %v1751
        %v1769 = vld [vmem:[#allocation2] sm:$0xff]
        %v1770 = vld [vmem:[#allocation2 + $0x8] sm:$0xff]
        %v1771 = vld [vmem:[#allocation2 + $0x10] sm:$0xff]
        %v1772 = vld [vmem:[#allocation2 + $0x18] sm:$0xff]
        %v1773 = vld [vmem:[#allocation2 + $0x20] sm:$0xff]
        %v1774 = vld [vmem:[#allocation2 + $0x28] sm:$0xff]
        %v1775 = vld [vmem:[#allocation2 + $0x30] sm:$0xff]
        %v1776 = vld [vmem:[#allocation2 + $0x38] sm:$0xff]
        %v1777 = vld [vmem:[%s1] sm:$0xf]
        %v1778 = vld [vmem:[%s1 + $0x4] sm:$0xf]
        %v1779 = vld [vmem:[%s1 + $0x8] sm:$0xf]
        %v1780 = vld [vmem:[%s1 + $0xc] sm:$0xf]
        %v1781 = vld [vmem:[%s1 + $0x10] sm:$0x3]
        %v1787 = vunpack.c.l.b16 %v1777
        %v1788 = vunpack.c.l.b16 %v1778
        %v1789 = vunpack.c.l.b16 %v1779
        %v1790 = vunpack.c.l.b16 %v1780
        %v1791 = vunpack.c.l.b16 %v1781
        %v1792 = vpack.c.b16 %v1788, %v1787
        %v1793 = vpack.c.b16 %v1790, %v1789
        %v1794 = vpack.c.b16 %v1791, %v1791
        %vm1797 = vcmask 293888
        %v1799 = vsel %vm1797, %v1769, 0
        %v1802 = vsel %vm1797, %v1770, 0
        %v1805 = vsel %vm1797, %v1771, 0
        %v1808 = vsel %vm1797, %v1772, 0
        %v1811 = vsel %vm1797, %v1773, 0
        %v1814 = vsel %vm1797, %v1774, 0
        %v1817 = vsel %vm1797, %v1775, 0
        %v1820 = vsel %vm1797, %v1776, 0
        %vm1822 = vcmask 1041408
        %v1824 = vsel %vm1822, %v1794, 0
        %1826 = vmatprep.subr.bf16.mxu0 0
        %1827 = vmatpush1.bf16.msra.mxu0 %v1792
        %1828 = vmatprep.subr.bf16.mxu0 0
        %1829 = vmatpush1.bf16.msra.mxu0 %v1793
        %1830 = vmatprep.subr.bf16.mxu0 0
        %1831 = vmatpush1.bf16.msra.mxu0 %v1824
        %1832 = vmatprep.subr.bf16.mxu0 0
        %1833 = vmatpush1.bf16.msra.mxu0 0
        %1834 = vmatprep.subr.bf16.mxu0 0
        %1835 = vmatpush1.bf16.msra.mxu0 0
        %1836 = vmatprep.subr.bf16.mxu0 0
        %1837 = vmatpush1.bf16.msra.mxu0 0
        %1838 = vmatprep.subr.bf16.mxu0 0
        %1839 = vmatpush1.bf16.msra.mxu0 0
        %1840 = vmatprep.subr.bf16.mxu0 0
        %1841 = vmatpush1.bf16.msra.mxu0 0
        %1842 = vmatprep.subr.bf16.mxu0 0
        %1843 = vmatpush1.bf16.msra.mxu0 0
        %1844 = vmatprep.subr.bf16.mxu0 0
        %1845 = vmatpush1.bf16.msra.mxu0 0
        %1846 = vmatprep.subr.bf16.mxu0 0
        %1847 = vmatpush1.bf16.msra.mxu0 0
        %1848 = vmatprep.subr.bf16.mxu0 0
        %1849 = vmatpush1.bf16.msra.mxu0 0
        %1850 = vmatprep.subr.bf16.mxu0 0
        %1851 = vmatpush1.bf16.msra.mxu0 0
        %1852 = vmatprep.subr.bf16.mxu0 0
        %1853 = vmatpush1.bf16.msra.mxu0 0
        %1854 = vmatprep.subr.bf16.mxu0 0
        %1855 = vmatpush1.bf16.msra.mxu0 0
        %1856 = vmatprep.subr.bf16.mxu0 0
        %1857 = vmatpush1.bf16.msra.mxu0 0
        %1858 = vmatprep.mubr.bf16.mxu0 0
        %1859 = vmatmul.mubr.bf16.gmra.mrb[0].mxu0 %v1799
        %v1860 = vpop.f32.mrb[0].mxu0
        %v1861 = vadd.f32 0.0, %v1860
        %v1862 = vpop.f32.mrb[0].mxu0
        %v1863 = vpop.f32.mrb[0].mxu0
        %v1864 = vadd.f32 0.0, %v1863
        %v1865 = vpop.f32.mrb[0].mxu0
        %1866 = vmatprep.mubr.bf16.mxu0 0
        %1867 = vmatmul.mubr.bf16.gmra.mrb[0].mxu0 %v1802
        %v1868 = vpop.f32.mrb[0].mxu0
        %v1869 = vadd.f32 0.0, %v1868
        %v1870 = vpop.f32.mrb[0].mxu0
        %v1871 = vpop.f32.mrb[0].mxu0
        %v1872 = vadd.f32 0.0, %v1871
        %v1873 = vpop.f32.mrb[0].mxu0
        %1874 = vmatprep.mubr.bf16.mxu0 0
        %1875 = vmatmul.mubr.bf16.gmra.mrb[0].mxu0 %v1805
        %v1876 = vpop.f32.mrb[0].mxu0
        %v1877 = vadd.f32 0.0, %v1876
        %v1878 = vpop.f32.mrb[0].mxu0
        %v1879 = vpop.f32.mrb[0].mxu0
        %v1880 = vadd.f32 0.0, %v1879
        %v1881 = vpop.f32.mrb[0].mxu0
        %1882 = vmatprep.mubr.bf16.mxu0 0
        %1883 = vmatmul.mubr.bf16.gmra.mrb[0].mxu0 %v1808
        %v1884 = vpop.f32.mrb[0].mxu0
        %v1885 = vadd.f32 0.0, %v1884
        %v1886 = vpop.f32.mrb[0].mxu0
        %v1887 = vpop.f32.mrb[0].mxu0
        %v1888 = vadd.f32 0.0, %v1887
        %v1889 = vpop.f32.mrb[0].mxu0
        %1890 = vmatprep.mubr.bf16.mxu0 0
        %1891 = vmatmul.mubr.bf16.gmra.mrb[0].mxu0 %v1811
        %v1892 = vpop.f32.mrb[0].mxu0
        %v1893 = vadd.f32 0.0, %v1892
        %v1894 = vpop.f32.mrb[0].mxu0
        %v1895 = vpop.f32.mrb[0].mxu0
        %v1896 = vadd.f32 0.0, %v1895
        %v1897 = vpop.f32.mrb[0].mxu0
        %1898 = vmatprep.mubr.bf16.mxu0 0
        %1899 = vmatmul.mubr.bf16.gmra.mrb[0].mxu0 %v1814
        %v1900 = vpop.f32.mrb[0].mxu0
        %v1901 = vadd.f32 0.0, %v1900
        %v1902 = vpop.f32.mrb[0].mxu0
        %v1903 = vpop.f32.mrb[0].mxu0
        %v1904 = vadd.f32 0.0, %v1903
        %v1905 = vpop.f32.mrb[0].mxu0
        %1906 = vmatprep.mubr.bf16.mxu0 0
        %1907 = vmatmul.mubr.bf16.gmra.mrb[0].mxu0 %v1817
        %v1908 = vpop.f32.mrb[0].mxu0
        %v1909 = vadd.f32 0.0, %v1908
        %v1910 = vpop.f32.mrb[0].mxu0
        %v1911 = vpop.f32.mrb[0].mxu0
        %v1912 = vadd.f32 0.0, %v1911
        %v1913 = vpop.f32.mrb[0].mxu0
        %1914 = vmatprep.mubr.bf16.mxu0 0
        %1915 = vmatmul.mubr.bf16.gmra.mrb[0].mxu0 %v1820
        %v1916 = vpop.f32.mrb[0].mxu0
        %v1917 = vadd.f32 0.0, %v1916
        %v1918 = vpop.f32.mrb[0].mxu0
        %v1919 = vpop.f32.mrb[0].mxu0
        %v1920 = vadd.f32 0.0, %v1919
        %v1921 = vpop.f32.mrb[0].mxu0
        %1922 = vdwg.mxu0
        %v1923 = vld [vmem:[%s178] sm:$0x1]
        %vm1924 = vcmask 64512
        %v1925 = vsel %vm1924, %v1861, 0.0
        %v1926 = vsel %vm1924, %v1864, 0.0
        %v1927 = vadd.f32 %v1925, %v1926
        %v1928 = vsel %vm1924, %v1869, 0.0
        %v1929 = vadd.f32 %v1927, %v1928
        %v1930 = vsel %vm1924, %v1872, 0.0
        %v1931 = vadd.f32 %v1929, %v1930
        %v1932 = vsel %vm1924, %v1877, 0.0
        %v1933 = vadd.f32 %v1931, %v1932
        %v1934 = vsel %vm1924, %v1880, 0.0
        %v1935 = vadd.f32 %v1933, %v1934
        %v1936 = vsel %vm1924, %v1885, 0.0
        %v1937 = vadd.f32 %v1935, %v1936
        %v1938 = vsel %vm1924, %v1888, 0.0
        %v1939 = vadd.f32 %v1937, %v1938
        %v1940 = vsel %vm1924, %v1893, 0.0
        %v1941 = vadd.f32 %v1939, %v1940
        %v1942 = vsel %vm1924, %v1896, 0.0
        %v1943 = vadd.f32 %v1941, %v1942
        %v1944 = vsel %vm1924, %v1901, 0.0
        %v1945 = vadd.f32 %v1943, %v1944
        %v1946 = vsel %vm1924, %v1904, 0.0
        %v1947 = vadd.f32 %v1945, %v1946
        %v1948 = vsel %vm1924, %v1909, 0.0
        %v1949 = vadd.f32 %v1947, %v1948
        %v1950 = vsel %vm1924, %v1912, 0.0
        %v1951 = vadd.f32 %v1949, %v1950
        %v1952 = vsel %vm1924, %v1917, 0.0
        %v1953 = vadd.f32 %v1951, %v1952
        %v1954 = vsel %vm1924, %v1920, 0.0
        %v1955 = vadd.f32 %v1953, %v1954
        %v1956 = vrot.slane %v1955, 4
        %v1957 = vadd.f32 %v1955, %v1956
        %v1958 = vrot.slane %v1957, 2
        %v1959 = vadd.f32 %v1957, %v1958
        %v1960 = vrot.slane %v1959, 1
        %v1961 = vadd.f32 %v1959, %v1960
        %v1962 = vadd.f32 %v1923, %v1961
        %vm1963 = vcmask 57344
        %1964 = vst.msk [vmem:[%s178] sm:$0x1] %vm1963, %v1962
        %v1965 = vld [vmem:[%s184] sm:$0x1]
        %v1966 = vmul.f32 %v1861, %v1861
        %v1967 = vmul.f32 %v1864, %v1864
        %v1968 = vmul.f32 %v1869, %v1869
        %v1969 = vmul.f32 %v1872, %v1872
        %v1970 = vmul.f32 %v1877, %v1877
        %v1971 = vmul.f32 %v1880, %v1880
        %v1972 = vmul.f32 %v1885, %v1885
        %v1973 = vmul.f32 %v1888, %v1888
        %v1974 = vmul.f32 %v1893, %v1893
        %v1975 = vmul.f32 %v1896, %v1896
        %v1976 = vmul.f32 %v1901, %v1901
        %v1977 = vmul.f32 %v1904, %v1904
        %v1978 = vmul.f32 %v1909, %v1909
        %v1979 = vmul.f32 %v1912, %v1912
        %v1980 = vmul.f32 %v1917, %v1917
        %v1981 = vmul.f32 %v1920, %v1920
        %v1982 = vsel %vm1924, %v1966, 0.0
        %v1983 = vsel %vm1924, %v1967, 0.0
        %v1984 = vadd.f32 %v1982, %v1983
        %v1985 = vsel %vm1924, %v1968, 0.0
        %v1986 = vadd.f32 %v1984, %v1985
        %v1987 = vsel %vm1924, %v1969, 0.0
        %v1988 = vadd.f32 %v1986, %v1987
        %v1989 = vsel %vm1924, %v1970, 0.0
        %v1990 = vadd.f32 %v1988, %v1989
        %v1991 = vsel %vm1924, %v1971, 0.0
        %v1992 = vadd.f32 %v1990, %v1991
        %v1993 = vsel %vm1924, %v1972, 0.0
        %v1994 = vadd.f32 %v1992, %v1993
        %v1995 = vsel %vm1924, %v1973, 0.0
        %v1996 = vadd.f32 %v1994, %v1995
        %v1997 = vsel %vm1924, %v1974, 0.0
        %v1998 = vadd.f32 %v1996, %v1997
        %v1999 = vsel %vm1924, %v1975, 0.0
        %v2000 = vadd.f32 %v1998, %v1999
        %v2001 = vsel %vm1924, %v1976, 0.0
        %v2002 = vadd.f32 %v2000, %v2001
        %v2003 = vsel %vm1924, %v1977, 0.0
        %v2004 = vadd.f32 %v2002, %v2003
        %v2005 = vsel %vm1924, %v1978, 0.0
        %v2006 = vadd.f32 %v2004, %v2005
        %v2007 = vsel %vm1924, %v1979, 0.0
        %v2008 = vadd.f32 %v2006, %v2007
        %v2009 = vsel %vm1924, %v1980, 0.0
        %v2010 = vadd.f32 %v2008, %v2009
        %v2011 = vsel %vm1924, %v1981, 0.0
        %v2012 = vadd.f32 %v2010, %v2011
        %v2013 = vrot.slane %v2012, 4
        %v2014 = vadd.f32 %v2012, %v2013
        %v2015 = vrot.slane %v2014, 2
        %v2016 = vadd.f32 %v2014, %v2015
        %v2017 = vrot.slane %v2016, 1
        %v2018 = vadd.f32 %v2016, %v2017
        %v2019 = vadd.f32 %v1965, %v2018
        %2020 = vst.msk [vmem:[%s184] sm:$0x1] %vm1963, %v2019
        %s2021 = sand.u32 %s88, 1
        %s2022 = scalar_lea.sflag [#allocation4], %s2021
        %s2023 = sand.u32 %s88, 1
        %s2024 = scalar_lea.vmem [#allocation3], %s2023
        %s2025 = sand.u32 %s114, 1
        %s2026 = scalar_lea.sflag [#allocation6], %s2025
        %s2027 = sand.u32 %s114, 1
        %s2028 = scalar_lea.vmem [#allocation5], %s2027
        // Predicated region
        $region33: #{tpu_custom_call.1} parent=27 // pred_check
          %p2029 = pneg %p98
        $region34: #{tpu_custom_call.1} parent=27 // pred_check_branch
          %2031 = sbr.rel (%p2029) target = $region36
        $region35: #{tpu_custom_call.1} parent=27 // pred_region
          %s2033 = ssub.s32 16, 16
          %2034 = vsyncadd %s2022, %s2033
          %s2035 = smul.addr %s25, 16
          %s2036 = scalar_lea.hbm %s2, %s2035
          %s2038 = sshll.u32 %s2024, 4
          %s2039 = int_to_ptr.vmem [resolvable:$true] %s2038
          %2041 = dma.vmem_to_hbm [thread:$0]  %s2039, 16, %s2036, %s2022
        $region36: #{tpu_custom_call.1} parent=27 // pred_fallthru
          _
        // Predicated region
        $region37: #{tpu_custom_call.1} parent=27 // pred_check
          %p2042 = pneg %p124
        $region38: #{tpu_custom_call.1} parent=27 // pred_check_branch
          %2044 = sbr.rel (%p2042) target = $region40
        $region39: #{tpu_custom_call.1} parent=27 // pred_region
          %s2046 = ssub.s32 16, 16
          %2047 = vsyncadd %s2026, %s2046
          %s2048 = smul.addr %s25, 16
          %s2049 = scalar_lea.hbm %s3, %s2048
          %s2051 = sshll.u32 %s2028, 4
          %s2052 = int_to_ptr.vmem [resolvable:$true] %s2051
          %2054 = dma.vmem_to_hbm [thread:$0]  %s2052, 16, %s2049, %s2026
        $region40: #{tpu_custom_call.1} parent=27 // pred_fallthru
          _
      $region28: #{tpu_custom_call.1} parent=5 // pred_fallthru
        _
      %p2055 = scmp.le.s32.totalorder 2, %s16
      // Predicated region
      $region41: #{tpu_custom_call.1} parent=5 // pred_check
        %p2056 = pneg %p2055
      $region42: #{tpu_custom_call.1} parent=5 // pred_check_branch
        %2058 = sbr.rel (%p2056) target = $region44
      $region43: #{tpu_custom_call.1} parent=5 // pred_region
        %s2059 = ssub.s32 %s16, 2
        // Predicated region
        $region45: #{tpu_custom_call.1} parent=43 // pred_check
          %p2060 = pneg %p104
        $region46: #{tpu_custom_call.1} parent=43 // pred_check_branch
          %2062 = sbr.rel (%p2060) target = $region48
        $region47: #{tpu_custom_call.1} parent=43 // pred_region
          %s2063 = sand.u32 %s89, 1
          %s2064 = scalar_lea.sflag [#allocation4], %s2063
          %s2065 = sand.u32 %s89, 1
          %s2066 = scalar_lea.vmem [#allocation3], %s2065
          %2067 = dma.done %s2064, 16
        $region48: #{tpu_custom_call.1} parent=43 // pred_fallthru
          _
        // Predicated region
        $region49: #{tpu_custom_call.1} parent=43 // pred_check
          %p2068 = pneg %p130
        $region50: #{tpu_custom_call.1} parent=43 // pred_check_branch
          %2070 = sbr.rel (%p2068) target = $region52
        $region51: #{tpu_custom_call.1} parent=43 // pred_region
          %s2071 = sand.u32 %s115, 1
          %s2072 = scalar_lea.sflag [#allocation6], %s2071
          %s2073 = sand.u32 %s115, 1
          %s2074 = scalar_lea.vmem [#allocation5], %s2073
          %2075 = dma.done %s2072, 16
        $region52: #{tpu_custom_call.1} parent=43 // pred_fallthru
          _
      $region44: #{tpu_custom_call.1} parent=5 // pred_fallthru
        _
    $region6: #{tpu_custom_call.1} parent=1 // loop_footer
      %s20 = sadd.s32 1, %s16
    $region7: #{tpu_custom_call.1} parent=1 // loop_footer_branch
      %15 = sbr.rel target = $region3
    $region8: #{tpu_custom_call.1} parent=1 // loop_exit
      _
    %2076 = vsyncpa [#allocation4], 1
    %s2077 = scalar_lea.sflag [#allocation4], 1
    %2078 = vsyncpa %s2077, 1
    %2079 = vsyncpa [#allocation6], 1
    %s2080 = scalar_lea.sflag [#allocation6], 1
    %2081 = vsyncpa %s2080, 1

</llo_original>
